<compile_context>
chip_gen: v7x
topology: tpu7x:2x2x1
jax: 0.10.0
libtpu: 0.0.40
codegen_flags: <defaults>
</compile_context>

<pallas_src>
import functools

import jax
import jax.numpy as jnp
from jax.experimental import pallas as pl
from jax.experimental.pallas import tpu as pltpu


def _round_up(x, m):
    return ((x + m - 1) // m) * m


def _phys_block_bytes(shape, itemsize):
    """Physical VMEM footprint of a block: last dim -> lanes (pad to 128),
    second-to-last -> sublanes (pad to 8 for 4B / 16 for 2B), leading dims dense."""
    if len(shape) == 1:
        return _round_up(shape[0] * itemsize, 512)
    *major, s, l = shape
    n = 1
    for m in major:
        n *= m
    sub = max(8, 32 // itemsize)
    return n * _round_up(s, sub) * _round_up(l, 128) * itemsize


def _vmem_capacity_bytes():
    try:
        return int(pltpu.get_tpu_info().vmem_capacity_bytes)
    except Exception:
        return 64 * 1024 * 1024   # conservative fallback: v7x per-TensorCore VMEM


def _conv_kernel(x_ref, w_ref, b_ref, o_ref, patch_ref, *, stride, kh, kw):
    """Grid = (N*T,): one batch element x one tile of output rows per step.

    x_ref     : (1, ROWS, Wp_need, C)   input row slab (bf16 or f32)
    w_ref     : (KH*KW*C, F_pad)        im2col dictionary
    b_ref     : (1, F_pad)              bias, f32
    o_ref     : (1, TH*OW_pad, F_pad)   output tile (lane-dense F)
    patch_ref : (TH, OW_pad, KH*KW*C)   VMEM scratch for the im2col patch
    """
    TH, OW_pad, K = patch_ref.shape
    C = x_ref.shape[-1]
    M = TH * OW_pad

    # Build the im2col patch directly in VMEM scratch: one masked lane-slice
    # store per tap; no big concatenate value kept live in vregs.
    if stride == 1:
        for i in range(kh):
            for j in range(kw):
                piece = x_ref[0, pl.ds(i, TH), pl.ds(j, OW_pad), :]       # (TH, OW_pad, C)
                patch_ref[:, :, pl.ds((i * kw + j) * C, C)] = piece
    else:
        xs = x_ref[0]                                                     # (ROWS, Wp_need, C)
        for i in range(kh):
            for j in range(kw):
                piece = jax.lax.slice(
                    xs,
                    (i, j, 0),
                    (i + (TH - 1) * stride + 1, j + (OW_pad - 1) * stride + 1, C),
                    (stride, stride, 1),
                )                                                         # (TH, OW_pad, C)
                patch_ref[:, :, pl.ds((i * kw + j) * C, C)] = piece

    # OW_pad is a multiple of 16 -> this reshape is layout preserving.
    patch = patch_ref[...].reshape(M, K)
    acc = jnp.dot(patch, w_ref[...], preferred_element_type=jnp.float32)  # (M, F_pad) f32
    # Elementwise epilogue stays in f32 (v5e has no bf16 VPU); cast only at the store.
    o_ref[0] = (acc + b_ref[...]).astype(o_ref.dtype)


def layer_pc_forward(x_nchw, dico_oihw, bias_nf11=None, *, stride=1, pad=0,
                     compute_dtype=jnp.bfloat16):
    """Pallas implementation of LayerPC.forward (groups=1).

    compute_dtype=bfloat16 (default): bf16 matmul operands / bf16 kernel output,
    f32 accumulation.  compute_dtype=float32: full-precision operands and output.
    """
    N, C, H, W = x_nchw.shape
    F, Cd, KH, KW = dico_oihw.shape
    assert Cd == C, "groups != 1 not supported"
    compute_dtype = jnp.dtype(compute_dtype)
    assert compute_dtype in (jnp.dtype(jnp.bfloat16), jnp.dtype(jnp.float32))
    itemsize = compute_dtype.itemsize

    Hp = H + 2 * pad
    Wp = W + 2 * pad
    OH = (Hp - KH) // stride + 1
    OW = (Wp - KW) // stride + 1
    assert OH >= 1 and OW >= 1

    # ---- tiling decisions -----------------------------------------------------
    F_pad = _round_up(F, 128)                 # lane-dense output / healthy MXU N dim
    OW_pad = _round_up(OW, 16)                # sublane-aligned (bf16 packs 16) => free reshape
    Kdim = KH * KW * C
    Wp_need = max(Wp, (OW_pad - 1) * stride + KW)

    cap = max(_vmem_capacity_bytes() - 16 * 1024 * 1024, 16 * 1024 * 1024)
    TARGET_M = 1024                           # feedback: M in the 512..2048 range

    def plan(th):
        th = max(1, min(th, OH))
        t_tiles = -(-OH // th)
        oh_pad = t_tiles * th
        rows = (th - 1) * stride + KH
        m = th * OW_pad
        # Physical (lane/sublane padded) footprints, double-buffered where pipelined.
        est = (2 * _phys_block_bytes((rows, Wp_need, C), itemsize)       # x slab
               + 2 * _phys_block_bytes((Kdim, F_pad), itemsize)          # dico
               + 2 * _phys_block_bytes((1, F_pad), 4)                    # bias
               + 2 * _phys_block_bytes((m, F_pad), itemsize)             # out tile
               + _phys_block_bytes((th, OW_pad, Kdim), itemsize)         # patch scratch
               + m * F_pad * 4)                                          # f32 acc value
        return th, t_tiles, oh_pad, rows, m, est

    TH, T, OH_pad, ROWS, M, est = plan(max(1, TARGET_M // OW_pad))
    while est > int(0.85 * cap) and TH > 1:
        TH, T, OH_pad, ROWS, M, est = plan(TH // 2)
    # TODO(synk): if even TH=1 does not fit (huge Wp*C or F), additionally tile OW / F.

    Hp_need = max(Hp, (OH_pad - 1) * stride + KH)

    # ---- host-side layout glue --------------------------------------------------
    x = jnp.transpose(x_nchw, (0, 2, 3, 1)).astype(compute_dtype)        # NCHW -> NHWC
    x = jnp.pad(x, ((0, 0), (pad, Hp_need - H - pad), (pad, Wp_need - W - pad), (0, 0)))

    # Overlapping output-row slabs (halo of KH-stride rows duplicated on the host) so the
    # kernel's x block is a clean per-step Blocked tile: only ~2 slabs live in VMEM and the
    # pipeline prefetches the next slab behind the current matmul.
    row_idx = (jnp.arange(T) * (TH * stride))[:, None] + jnp.arange(ROWS)[None, :]
    x_slabs = jnp.take(x, row_idx, axis=1)                               # (N, T, ROWS, Wp_need, C)
    x_slabs = x_slabs.reshape(N * T, ROWS, Wp_need, C)

    w = jnp.transpose(dico_oihw, (2, 3, 1, 0)).reshape(Kdim, F)          # OIHW -> (kh,kw,c) x F
    w = jnp.pad(w, ((0, 0), (0, F_pad - F))).astype(compute_dtype)

    if bias_nf11 is None:
        b = jnp.zeros((1, F_pad), jnp.float32)
    else:
        b = jnp.pad(bias_nf11.reshape(1, F).astype(jnp.float32),
                    ((0, 0), (0, F_pad - F)))

    # ---- generation-aware VMEM limit + advisory cost ----------------------------
    vmem_limit = int(min(cap, max(1.25 * est, 8 * 1024 * 1024)))
    flops = 2 * N * T * M * Kdim * F_pad
    bytes_accessed = (N * T * ROWS * Wp_need * C * itemsize
                      + Kdim * F_pad * itemsize + F_pad * 4
                      + N * T * M * F_pad * itemsize)

    kernel = functools.partial(_conv_kernel, stride=stride, kh=KH, kw=KW)

    out = pl.pallas_call(
        kernel,
        out_shape=jax.ShapeDtypeStruct((N * T, M, F_pad), compute_dtype),
        grid=(N * T,),
        in_specs=[
            pl.BlockSpec((1, ROWS, Wp_need, C), lambda g: (g, 0, 0, 0)),
            pl.BlockSpec((Kdim, F_pad), lambda g: (0, 0)),
            pl.BlockSpec((1, F_pad), lambda g: (0, 0)),
        ],
        out_specs=pl.BlockSpec((1, M, F_pad), lambda g: (g, 0, 0)),
        scratch_shapes=[pltpu.VMEM((TH, OW_pad, Kdim), compute_dtype)],
        compiler_params=pltpu.CompilerParams(
            dimension_semantics=("parallel",),
            vmem_limit_bytes=vmem_limit,
        ),
        cost_estimate=pl.CostEstimate(flops=flops, transcendentals=0,
                                      bytes_accessed=bytes_accessed),
    )(x_slabs, w, b)

    out = out.reshape(N, OH_pad, OW_pad, F_pad)[:, :OH, :OW, :F]         # drop padding
    out = jnp.transpose(out, (0, 3, 1, 2))                               # NHWC -> NCHW
    return out.astype(jnp.float32)


def init_layer_pc_params(key, dico_shape, bias=True, normalize_dico=True):
    """Deterministic re-implementation of LayerPC.__init__ / init_dico."""
    F, C, KH, KW = dico_shape
    dico = jax.random.normal(key, dico_shape, dtype=jnp.float32)
    if normalize_dico:
        nrm = jnp.sqrt(jnp.sum(dico * dico, axis=(1, 2, 3), keepdims=True))
        dico = dico / nrm
    else:
        dico = dico * jnp.sqrt(2.0 / (KH * KW * C))
    # bias=False in the module means `self.bias = 0` (scalar); represent as None here.
    b = jnp.zeros((1, F, 1, 1), jnp.float32) if bias else None
    return dico, b


if __name__ == "__main__":
    key = jax.random.PRNGKey(0)
    kx, kd = jax.random.split(key)

    # small shapes consistent with LayerPC: dico_shape = (N_atoms, C_in, KH, KW)
    N, C, H, W = 2, 4, 16, 16
    F, KH, KW = 8, 3, 3
    stride, pad = 1, 0

    x = jax.random.normal(kx, (N, C, H, W), dtype=jnp.float32)
    dico, bias = init_layer_pc_params(kd, (F, C, KH, KW), bias=True, normalize_dico=True)

    OH = (H + 2 * pad - KH) // stride + 1
    OW = (W + 2 * pad - KW) // stride + 1

    # full-precision reference (highest-precision conv, f32 everywhere)
    ref = jax.lax.conv_general_dilated(
        x, dico, window_strides=(stride, stride),
        padding=[(pad, pad), (pad, pad)],
        dimension_numbers=("NCHW", "OIHW", "NCHW"),
        precision=jax.lax.Precision.HIGHEST,
    ) + bias

    # default bf16-operand / f32-accum path
    out_bf16 = layer_pc_forward(x, dico, bias, stride=stride, pad=pad)
    out_bf16 = jax.block_until_ready(out_bf16)
    assert out_bf16.shape == (N, F, OH, OW)
    assert jnp.allclose(out_bf16, ref, atol=5e-2, rtol=5e-2), "bf16 path mismatch vs reference"

    # full-precision operand path (addresses the f32-fidelity concern); tolerance kept
    # loose enough to be robust to the MXU's f32 pass mode.
    out_f32 = layer_pc_forward(x, dico, bias, stride=stride, pad=pad,
                               compute_dtype=jnp.float32)
    out_f32 = jax.block_until_ready(out_f32)
    assert out_f32.shape == (N, F, OH, OW)
    assert jnp.allclose(out_f32, ref, atol=5e-2, rtol=5e-2), "f32 path mismatch vs reference"

    print("KERNEL_OK")
</pallas_src>

<mosaic_0001>
module attributes {stable_mosaic.version = 11 : i64} {
  func.func @_conv_kernel(%arg0: i32, %arg1: memref<1x16x18x4xbf16, #tpu.memory_space<vmem>>, %arg2: memref<36x128xbf16, #tpu.memory_space<vmem>>, %arg3: memref<1x128xf32, #tpu.memory_space<vmem>>, %arg4: memref<1x224x128xbf16, #tpu.memory_space<vmem>>, %arg5: memref<14x16x36xbf16, #tpu.memory_space<vmem>>) attributes {dimension_semantics = [#tpu.dimension_semantics<parallel>], iteration_bounds = array<i64: 2>, scalar_prefetch = 0 : i64, scratch_operands = 1 : i64, tpu.core_type = #tpu.core_type<tc>, window_params = [{transform_indices = @transform_0, window_bounds = array<i64: 1, 16, 18, 4>}, {pipeline_mode = #tpu.pipeline_mode<synchronous>, transform_indices = @transform_1, window_bounds = array<i64: 36, 128>}, {pipeline_mode = #tpu.pipeline_mode<synchronous>, transform_indices = @transform_2, window_bounds = array<i64: 1, 128>}, {transform_indices = @transform_3, window_bounds = array<i64: 1, 224, 128>}]} {
    %c0 = arith.constant 0 : index
    %c0_0 = arith.constant 0 : index
    %c0_1 = arith.constant 0 : index
    %c0_2 = arith.constant 0 : index
    %0 = vector.load %arg1[%c0, %c0_0, %c0_1, %c0_2] : memref<1x16x18x4xbf16, #tpu.memory_space<vmem>>, vector<1x14x16x4xbf16>
    %1 = vector.shape_cast %0 : vector<1x14x16x4xbf16> to vector<14x16x4xbf16>
    %c0_3 = arith.constant 0 : index
    %c0_4 = arith.constant 0 : index
    %c0_5 = arith.constant 0 : index
    %2 = vector.load %arg5[%c0_3, %c0_4, %c0_5] : memref<14x16x36xbf16, #tpu.memory_space<vmem>>, vector<14x16x4xbf16>
    tpu.vector_store %arg5[%c0_3, %c0_4, %c0_5], %1 {strides = array<i32>} : memref<14x16x36xbf16, #tpu.memory_space<vmem>>, vector<14x16x4xbf16>,
    %c0_6 = arith.constant 0 : index
    %c0_7 = arith.constant 0 : index
    %c1 = arith.constant 1 : index
    %c0_8 = arith.constant 0 : index
    %3 = vector.load %arg1[%c0_6, %c0_7, %c1, %c0_8] : memref<1x16x18x4xbf16, #tpu.memory_space<vmem>>, vector<1x14x16x4xbf16>
    %4 = vector.shape_cast %3 : vector<1x14x16x4xbf16> to vector<14x16x4xbf16>
    %c0_9 = arith.constant 0 : index
    %c0_10 = arith.constant 0 : index
    %c4 = arith.constant 4 : index
    %5 = vector.load %arg5[%c0_9, %c0_10, %c4] : memref<14x16x36xbf16, #tpu.memory_space<vmem>>, vector<14x16x4xbf16>
    tpu.vector_store %arg5[%c0_9, %c0_10, %c4], %4 {strides = array<i32>} : memref<14x16x36xbf16, #tpu.memory_space<vmem>>, vector<14x16x4xbf16>,
    %c0_11 = arith.constant 0 : index
    %c0_12 = arith.constant 0 : index
    %c2 = arith.constant 2 : index
    %c0_13 = arith.constant 0 : index
    %6 = vector.load %arg1[%c0_11, %c0_12, %c2, %c0_13] : memref<1x16x18x4xbf16, #tpu.memory_space<vmem>>, vector<1x14x16x4xbf16>
    %7 = vector.shape_cast %6 : vector<1x14x16x4xbf16> to vector<14x16x4xbf16>
    %c0_14 = arith.constant 0 : index
    %c0_15 = arith.constant 0 : index
    %c8 = arith.constant 8 : index
    %8 = vector.load %arg5[%c0_14, %c0_15, %c8] : memref<14x16x36xbf16, #tpu.memory_space<vmem>>, vector<14x16x4xbf16>
    tpu.vector_store %arg5[%c0_14, %c0_15, %c8], %7 {strides = array<i32>} : memref<14x16x36xbf16, #tpu.memory_space<vmem>>, vector<14x16x4xbf16>,
    %c0_16 = arith.constant 0 : index
    %c1_17 = arith.constant 1 : index
    %c0_18 = arith.constant 0 : index
    %c0_19 = arith.constant 0 : index
    %9 = vector.load %arg1[%c0_16, %c1_17, %c0_18, %c0_19] : memref<1x16x18x4xbf16, #tpu.memory_space<vmem>>, vector<1x14x16x4xbf16>
    %10 = vector.shape_cast %9 : vector<1x14x16x4xbf16> to vector<14x16x4xbf16>
    %c0_20 = arith.constant 0 : index
    %c0_21 = arith.constant 0 : index
    %c12 = arith.constant 12 : index
    %11 = vector.load %arg5[%c0_20, %c0_21, %c12] : memref<14x16x36xbf16, #tpu.memory_space<vmem>>, vector<14x16x4xbf16>
    tpu.vector_store %arg5[%c0_20, %c0_21, %c12], %10 {strides = array<i32>} : memref<14x16x36xbf16, #tpu.memory_space<vmem>>, vector<14x16x4xbf16>,
    %c0_22 = arith.constant 0 : index
    %c1_23 = arith.constant 1 : index
    %c1_24 = arith.constant 1 : index
    %c0_25 = arith.constant 0 : index
    %12 = vector.load %arg1[%c0_22, %c1_23, %c1_24, %c0_25] : memref<1x16x18x4xbf16, #tpu.memory_space<vmem>>, vector<1x14x16x4xbf16>
    %13 = vector.shape_cast %12 : vector<1x14x16x4xbf16> to vector<14x16x4xbf16>
    %c0_26 = arith.constant 0 : index
    %c0_27 = arith.constant 0 : index
    %c16 = arith.constant 16 : index
    %14 = vector.load %arg5[%c0_26, %c0_27, %c16] : memref<14x16x36xbf16, #tpu.memory_space<vmem>>, vector<14x16x4xbf16>
    tpu.vector_store %arg5[%c0_26, %c0_27, %c16], %13 {strides = array<i32>} : memref<14x16x36xbf16, #tpu.memory_space<vmem>>, vector<14x16x4xbf16>,
    %c0_28 = arith.constant 0 : index
    %c1_29 = arith.constant 1 : index
    %c2_30 = arith.constant 2 : index
    %c0_31 = arith.constant 0 : index
    %15 = vector.load %arg1[%c0_28, %c1_29, %c2_30, %c0_31] : memref<1x16x18x4xbf16, #tpu.memory_space<vmem>>, vector<1x14x16x4xbf16>
    %16 = vector.shape_cast %15 : vector<1x14x16x4xbf16> to vector<14x16x4xbf16>
    %c0_32 = arith.constant 0 : index
    %c0_33 = arith.constant 0 : index
    %c20 = arith.constant 20 : index
    %17 = vector.load %arg5[%c0_32, %c0_33, %c20] : memref<14x16x36xbf16, #tpu.memory_space<vmem>>, vector<14x16x4xbf16>
    tpu.vector_store %arg5[%c0_32, %c0_33, %c20], %16 {strides = array<i32>} : memref<14x16x36xbf16, #tpu.memory_space<vmem>>, vector<14x16x4xbf16>,
    %c0_34 = arith.constant 0 : index
    %c2_35 = arith.constant 2 : index
    %c0_36 = arith.constant 0 : index
    %c0_37 = arith.constant 0 : index
    %18 = vector.load %arg1[%c0_34, %c2_35, %c0_36, %c0_37] : memref<1x16x18x4xbf16, #tpu.memory_space<vmem>>, vector<1x14x16x4xbf16>
    %19 = vector.shape_cast %18 : vector<1x14x16x4xbf16> to vector<14x16x4xbf16>
    %c0_38 = arith.constant 0 : index
    %c0_39 = arith.constant 0 : index
    %c24 = arith.constant 24 : index
    %20 = vector.load %arg5[%c0_38, %c0_39, %c24] : memref<14x16x36xbf16, #tpu.memory_space<vmem>>, vector<14x16x4xbf16>
    tpu.vector_store %arg5[%c0_38, %c0_39, %c24], %19 {strides = array<i32>} : memref<14x16x36xbf16, #tpu.memory_space<vmem>>, vector<14x16x4xbf16>,
    %c0_40 = arith.constant 0 : index
    %c2_41 = arith.constant 2 : index
    %c1_42 = arith.constant 1 : index
    %c0_43 = arith.constant 0 : index
    %21 = vector.load %arg1[%c0_40, %c2_41, %c1_42, %c0_43] : memref<1x16x18x4xbf16, #tpu.memory_space<vmem>>, vector<1x14x16x4xbf16>
    %22 = vector.shape_cast %21 : vector<1x14x16x4xbf16> to vector<14x16x4xbf16>
    %c0_44 = arith.constant 0 : index
    %c0_45 = arith.constant 0 : index
    %c28 = arith.constant 28 : index
    %23 = vector.load %arg5[%c0_44, %c0_45, %c28] : memref<14x16x36xbf16, #tpu.memory_space<vmem>>, vector<14x16x4xbf16>
    tpu.vector_store %arg5[%c0_44, %c0_45, %c28], %22 {strides = array<i32>} : memref<14x16x36xbf16, #tpu.memory_space<vmem>>, vector<14x16x4xbf16>,
    %c0_46 = arith.constant 0 : index
    %c2_47 = arith.constant 2 : index
    %c2_48 = arith.constant 2 : index
    %c0_49 = arith.constant 0 : index
    %24 = vector.load %arg1[%c0_46, %c2_47, %c2_48, %c0_49] : memref<1x16x18x4xbf16, #tpu.memory_space<vmem>>, vector<1x14x16x4xbf16>
    %25 = vector.shape_cast %24 : vector<1x14x16x4xbf16> to vector<14x16x4xbf16>
    %c0_50 = arith.constant 0 : index
    %c0_51 = arith.constant 0 : index
    %c32 = arith.constant 32 : index
    %26 = vector.load %arg5[%c0_50, %c0_51, %c32] : memref<14x16x36xbf16, #tpu.memory_space<vmem>>, vector<14x16x4xbf16>
    tpu.vector_store %arg5[%c0_50, %c0_51, %c32], %25 {strides = array<i32>} : memref<14x16x36xbf16, #tpu.memory_space<vmem>>, vector<14x16x4xbf16>,
    %c0_52 = arith.constant 0 : index
    %c0_53 = arith.constant 0 : index
    %c0_54 = arith.constant 0 : index
    %27 = vector.load %arg5[%c0_52, %c0_53, %c0_54] : memref<14x16x36xbf16, #tpu.memory_space<vmem>>, vector<14x16x36xbf16>
    %28 = vector.shape_cast %27 : vector<14x16x36xbf16> to vector<224x36xbf16>
    %c0_55 = arith.constant 0 : index
    %c0_56 = arith.constant 0 : index
    %29 = vector.load %arg2[%c0_55, %c0_56] : memref<36x128xbf16, #tpu.memory_space<vmem>>, vector<36x128xbf16>
    %cst = arith.constant dense<0.000000e+00> : vector<224x128xf32>
    %30 = tpu.matmul %28, %29, %cst {dimension_numbers = #tpu.dot_dimension_numbers<[1], [0], [0], [1], [0, 0, 1, 1], [], []>} : vector<224x36xbf16>, vector<36x128xbf16>, vector<224x128xf32> -> vector<224x128xf32>
    %c0_57 = arith.constant 0 : index
    %c0_58 = arith.constant 0 : index
    %31 = vector.load %arg3[%c0_57, %c0_58] : memref<1x128xf32, #tpu.memory_space<vmem>>, vector<1x128xf32>
    %32 = vector.broadcast %31 : vector<1x128xf32> to vector<224x128xf32>
    %33 = arith.addf %30, %32 : vector<224x128xf32>
    %34 = arith.truncf %33 : vector<224x128xf32> to vector<224x128xbf16>
    %c0_59 = arith.constant 0 : index
    %c0_60 = arith.constant 0 : index
    %c0_61 = arith.constant 0 : index
    %35 = vector.load %arg4[%c0_59, %c0_60, %c0_61] : memref<1x224x128xbf16, #tpu.memory_space<vmem>>, vector<1x224x128xbf16>
    %36 = vector.shape_cast %35 : vector<1x224x128xbf16> to vector<224x128xbf16>
    %37 = vector.shape_cast %34 : vector<224x128xbf16> to vector<1x224x128xbf16>
    tpu.vector_store %arg4[%c0_59, %c0_60, %c0_61], %37 {strides = array<i32>} : memref<1x224x128xbf16, #tpu.memory_space<vmem>>, vector<1x224x128xbf16>,
    return
  }
  func.func @transform_0(%arg0: i32) -> (i32, i32, i32, i32) {
    %c0_i32 = arith.constant 0 : i32
    %c0_i32_0 = arith.constant 0 : i32
    %c0_i32_1 = arith.constant 0 : i32
    %c0_i32_2 = arith.constant 0 : i32
    return %arg0, %c0_i32, %c0_i32_0, %c0_i32_1 : i32, i32, i32, i32
  }
  func.func @transform_1(%arg0: i32) -> (i32, i32) {
    %c0_i32 = arith.constant 0 : i32
    %c0_i32_0 = arith.constant 0 : i32
    %c0_i32_1 = arith.constant 0 : i32
    return %c0_i32, %c0_i32_0 : i32, i32
  }
  func.func @transform_2(%arg0: i32) -> (i32, i32) {
    %c0_i32 = arith.constant 0 : i32
    %c0_i32_0 = arith.constant 0 : i32
    %c0_i32_1 = arith.constant 0 : i32
    return %c0_i32, %c0_i32_0 : i32, i32
  }
  func.func @transform_3(%arg0: i32) -> (i32, i32, i32) {
    %c0_i32 = arith.constant 0 : i32
    %c0_i32_0 = arith.constant 0 : i32
    %c0_i32_1 = arith.constant 0 : i32
    return %arg0, %c0_i32, %c0_i32_0 : i32, i32, i32
  }
}

</mosaic_0001>

<llo_original>
// kernel: tpu_custom_call.1
$region0: #{tpu_custom_call.1}
  #allocation0 [shape = 'u32[]', space=smem, size = 0x4, offset = 0x4, fixed_abs, tag = 'smem constant byte address 0x4 - core index']
  #allocation1 [shape = 'u32[144,128]{1,0:T(1,128)}', space=vmem, size = 0x12000, scoped, tag = 'internal scratch']
  #allocation2 [shape = 'bf16[14,16,36]{2,1,0:T(16,128)(2,1)}', space=vmem, size = 0xe000, scoped, tag = 'scratch operand']
  %s0 = inlined_call_operand.vmem [shape: bf16[2,16,18,4], index: 0, kind: input, shape index: {}]
  %s1 = inlined_call_operand.vmem [shape: bf16[36,128], index: 1, kind: input, shape index: {}]
  %s2 = inlined_call_operand.vmem [shape: f32[1,128], index: 2, kind: input, shape index: {}]
  %s3 = inlined_call_operand.hbm [shape: bf16[2,224,128], index: 3, kind: output, shape index: {}]
  %s4 = sld [smem:[#allocation0]]
  $region45: #{tpu_custom_call.1} parent=0
    _
  %s6 = ssub.s32 1, %s4
  %s7 = scalar_select 0, %s6, %s4
  $region1: #{tpu_custom_call.1} parent=0
    #allocation3 [shape = 'u8[114688]{0}', space=vmem, size = 0x1c000, scoped, tag = 'output window, operand 0']
    #allocation4 [shape = 's32[2]{0}', space=sflag, size = 0x8, scoped, tag = 'scoped memory for tpu_custom_call.1']
    %8 = vsyncpa [#allocation4], 0
    %s9 = scalar_lea.sflag [#allocation4], 1
    %10 = vsyncpa %s9, 0
    loop: start=0, step=1, limit=4
    $region2: #{tpu_custom_call.1} parent=1 // loop_pre_header
      _
    $region3: #{tpu_custom_call.1} parent=1 // loop_header
      %s12 = sphi 0, %s16
      %p13 = scmp.ge.s32.totalorder %s12, 4
      %s22 = sphi 0, %s24
      %s25 = sphi 0, %s22
      %s26 = sphi 0, %s25
      %s42 = sphi 0, %s26
      %s46 = sphi 0, %s46
      %s48 = sphi 0, %s46
      %s49 = sphi 0, %s48
      %s63 = sphi 0, %s49
      %s67 = sphi 0, %s67
      %s69 = sphi 0, %s67
      %s70 = sphi 0, %s69
      %s84 = sphi 0, %s70
      %s90 = sphi 0, %s92
      %s93 = sphi 0, %s90
      %s94 = sphi 0, %s93
      %s110 = sphi 0, %s94
    $region4: #{tpu_custom_call.1} parent=1 // loop_header_branch
      %15 = sbr.rel (%p13) target = $region8
    $region5: #{tpu_custom_call.1} parent=1 // loop_body
      %s17 = ssub.s32 %s12, 1
      %s18 = ssub.s32 %s12, 2
      %s19 = sadd.s32 %s12, 1
      %s20 = ssub.s32 %s12, %s19
      %p21 = scmp.eq.s32.totalorder %s20, 0
      %s23 = sadd.s32 %s22, 1
      %s24 = scalar_select %p21, %s22, %s23
      %p27 = pneg %p21
      %p28 = scmp.eq.s32.totalorder %s12, 1
      %p29 = por %p27, %p28
      %p30 = scmp.ne.s32.totalorder %s22, %s25
      %p31 = scmp.eq.s32.totalorder %s12, 0
      %p32 = por %p30, %p31
      %p33 = scmp.ne.s32.totalorder %s22, %s25
      %p34 = scmp.eq.s32.totalorder %s17, 1
      %p35 = por %p33, %p34
      %p36 = scmp.ne.s32.totalorder %s25, %s26
      %p37 = scmp.eq.s32.totalorder %s17, 0
      %p38 = por %p36, %p37
      %p39 = scmp.ne.s32.totalorder %s25, %s26
      %p40 = scmp.eq.s32.totalorder %s18, 1
      %p41 = por %p39, %p40
      %p43 = scmp.ne.s32.totalorder %s26, %s42
      %p44 = scmp.eq.s32.totalorder %s18, 0
      %p45 = por %p43, %p44
      %s47 = sadd.s32 %s46, 1
      %p50 = scmp.eq.s32.totalorder %s12, 1
      %p51 = scmp.ne.s32.totalorder %s46, %s48
      %p52 = scmp.eq.s32.totalorder %s12, 0
      %p53 = por %p51, %p52
      %p54 = scmp.ne.s32.totalorder %s46, %s48
      %p55 = scmp.eq.s32.totalorder %s17, 1
      %p56 = por %p54, %p55
      %p57 = scmp.ne.s32.totalorder %s48, %s49
      %p58 = scmp.eq.s32.totalorder %s17, 0
      %p59 = por %p57, %p58
      %p60 = scmp.ne.s32.totalorder %s48, %s49
      %p61 = scmp.eq.s32.totalorder %s18, 1
      %p62 = por %p60, %p61
      %p64 = scmp.ne.s32.totalorder %s49, %s63
      %p65 = scmp.eq.s32.totalorder %s18, 0
      %p66 = por %p64, %p65
      %s68 = sadd.s32 %s67, 1
      %p71 = scmp.eq.s32.totalorder %s12, 1
      %p72 = scmp.ne.s32.totalorder %s67, %s69
      %p73 = scmp.eq.s32.totalorder %s12, 0
      %p74 = por %p72, %p73
      %p75 = scmp.ne.s32.totalorder %s67, %s69
      %p76 = scmp.eq.s32.totalorder %s17, 1
      %p77 = por %p75, %p76
      %p78 = scmp.ne.s32.totalorder %s69, %s70
      %p79 = scmp.eq.s32.totalorder %s17, 0
      %p80 = por %p78, %p79
      %p81 = scmp.ne.s32.totalorder %s69, %s70
      %p82 = scmp.eq.s32.totalorder %s18, 1
      %p83 = por %p81, %p82
      %p85 = scmp.ne.s32.totalorder %s70, %s84
      %p86 = scmp.eq.s32.totalorder %s18, 0
      %p87 = por %p85, %p86
      %s88 = ssub.s32 %s12, %s19
      %p89 = scmp.eq.s32.totalorder %s88, 0
      %s91 = sadd.s32 %s90, 1
      %s92 = scalar_select %p89, %s90, %s91
      %p95 = pneg %p89
      %p96 = scmp.eq.s32.totalorder %s12, 1
      %p97 = por %p95, %p96
      %p98 = scmp.ne.s32.totalorder %s90, %s93
      %p99 = scmp.eq.s32.totalorder %s12, 0
      %p100 = por %p98, %p99
      %p101 = scmp.ne.s32.totalorder %s90, %s93
      %p102 = scmp.eq.s32.totalorder %s17, 1
      %p103 = por %p101, %p102
      %p104 = scmp.ne.s32.totalorder %s93, %s94
      %p105 = scmp.eq.s32.totalorder %s17, 0
      %p106 = por %p104, %p105
      %p107 = scmp.ne.s32.totalorder %s93, %s94
      %p108 = scmp.eq.s32.totalorder %s18, 1
      %p109 = por %p107, %p108
      %p111 = scmp.ne.s32.totalorder %s94, %s110
      %p112 = scmp.eq.s32.totalorder %s18, 0
      %p113 = por %p111, %p112
      %p114 = scmp.le.s32.totalorder 1, %s12
      %p115 = scmp.lt.s32.totalorder %s12, 3
      %p116 = pnand %p114, %p115
      %p117 = pneg %p116
      // Predicated region
      $region9: #{tpu_custom_call.1} parent=5 // pred_check
        _
      $region10: #{tpu_custom_call.1} parent=5 // pred_check_branch
        %119 = sbr.rel (%p116) target = $region12
      $region11: #{tpu_custom_call.1} parent=5 // pred_region
        %s120 = ssub.s32 %s12, 1
        // Predicated region
        $region13: #{tpu_custom_call.1} parent=11 // pred_check
          %p121 = pneg %p59
        $region14: #{tpu_custom_call.1} parent=11 // pred_check_branch
          %123 = sbr.rel (%p121) target = $region16
        $region15: #{tpu_custom_call.1} parent=11 // pred_region
          _
        $region16: #{tpu_custom_call.1} parent=11 // pred_fallthru
          _
        // Predicated region
        $region17: #{tpu_custom_call.1} parent=11 // pred_check
          %p124 = pneg %p80
        $region18: #{tpu_custom_call.1} parent=11 // pred_check_branch
          %126 = sbr.rel (%p124) target = $region20
        $region19: #{tpu_custom_call.1} parent=11 // pred_region
          _
        $region20: #{tpu_custom_call.1} parent=11 // pred_fallthru
          _
      $region12: #{tpu_custom_call.1} parent=5 // pred_fallthru
        _
      %p127 = scmp.lt.s32.totalorder %s12, 2
      // Predicated region
      $region21: #{tpu_custom_call.1} parent=5 // pred_check
        %p128 = pneg %p127
      $region22: #{tpu_custom_call.1} parent=5 // pred_check_branch
        %130 = sbr.rel (%p128) target = $region24
      $region23: #{tpu_custom_call.1} parent=5 // pred_region
        // Predicated region
        $region25: #{tpu_custom_call.1} parent=23 // pred_check
          %p131 = pneg %p32
        $region26: #{tpu_custom_call.1} parent=23 // pred_check_branch
          %133 = sbr.rel (%p131) target = $region28
        $region27: #{tpu_custom_call.1} parent=23 // pred_region
          %p134 = scmp.lt.s32.totalorder %s12, 1
          %s135 = scalar_select %p134, %s12, 1
          %s136 = smul.addr %s135, 48
          %s137 = smul.addr %s136, 4
          %s138 = scalar_lea.vmem %s0, %s137
        $region28: #{tpu_custom_call.1} parent=23 // pred_fallthru
          _
      $region24: #{tpu_custom_call.1} parent=5 // pred_fallthru
        _
      %p139 = scmp.le.s32.totalorder 1, %s12
      %p140 = scmp.lt.s32.totalorder %s12, 3
      %p141 = pnand %p139, %p140
      %p142 = pneg %p141
      // Predicated region
      $region29: #{tpu_custom_call.1} parent=5 // pred_check
        _
      $region30: #{tpu_custom_call.1} parent=5 // pred_check_branch
        %144 = sbr.rel (%p141) target = $region32
      $region31: #{tpu_custom_call.1} parent=5 // pred_region
        %s145 = ssub.s32 %s12, 1
        %p146 = scmp.lt.s32.totalorder %s17, 1
        %s147 = scalar_select %p146, %s17, 1
        %s148 = smul.addr %s147, 48
        %s149 = smul.addr %s148, 4
        %s150 = scalar_lea.vmem %s0, %s149
        %p151 = pneg %p38
        %p152 = pneg %p35
        %p153 = pneg %p59
        %p154 = pneg %p56
        %p155 = pneg %p80
        %p156 = pneg %p77
        %p157 = pneg %p106
        %p158 = pneg %p103
        %s159 = sand.u32 %s93, 1
        %s160 = scalar_lea.sflag [#allocation4], %s159
        %s161 = sand.u32 %s93, 1
        %s162 = smul.addr %s161, 112
        %s163 = scalar_lea.vmem [#allocation3], %s162
        %p164 = scmp.lt.s32.totalorder %s17, 1
        %s165 = scalar_select %p164, %s17, 1
        %s166 = smul.addr %s165, 48
        %s167 = smul.addr %s166, 4
        %s168 = scalar_lea.vmem %s0, %s167
        %v170 = vld [vmem:[%s168] sm:$0xf]
        %v171 = vld [vmem:[%s168 + $0x4] sm:$0xf]
        %v172 = vld [vmem:[%s168 + $0xc] sm:$0xf]
        %v173 = vld [vmem:[%s168 + $0x10] sm:$0xf]
        %v174 = vld [vmem:[%s168 + $0x18] sm:$0xf]
        %v175 = vld [vmem:[%s168 + $0x1c] sm:$0xf]
        %v176 = vld [vmem:[%s168 + $0x24] sm:$0xf]
        %v177 = vld [vmem:[%s168 + $0x28] sm:$0xf]
        %v178 = vld [vmem:[%s168 + $0x30] sm:$0xf]
        %v179 = vld [vmem:[%s168 + $0x34] sm:$0xf]
        %v180 = vld [vmem:[%s168 + $0x3c] sm:$0xf]
        %v181 = vld [vmem:[%s168 + $0x40] sm:$0xf]
        %v182 = vld [vmem:[%s168 + $0x48] sm:$0xf]
        %v183 = vld [vmem:[%s168 + $0x4c] sm:$0xf]
        %v184 = vld [vmem:[%s168 + $0x54] sm:$0xf]
        %v185 = vld [vmem:[%s168 + $0x58] sm:$0xf]
        %v186 = vld [vmem:[%s168 + $0x60] sm:$0xf]
        %v187 = vld [vmem:[%s168 + $0x64] sm:$0xf]
        %v188 = vld [vmem:[%s168 + $0x6c] sm:$0xf]
        %v189 = vld [vmem:[%s168 + $0x70] sm:$0xf]
        %v190 = vld [vmem:[%s168 + $0x78] sm:$0xf]
        %v191 = vld [vmem:[%s168 + $0x7c] sm:$0xf]
        %v192 = vld [vmem:[%s168 + $0x84] sm:$0xf]
        %v193 = vld [vmem:[%s168 + $0x88] sm:$0xf]
        %v194 = vld [vmem:[%s168 + $0x90] sm:$0xf]
        %v195 = vld [vmem:[%s168 + $0x94] sm:$0xf]
        %v196 = vld [vmem:[%s168 + $0x9c] sm:$0xf]
        %v197 = vld [vmem:[%s168 + $0xa0] sm:$0xf]
        %v226 = vunpack.c.l.b16 %v170
        %v227 = vunpack.c.l.b16 %v171
        %v228 = vunpack.c.l.b16 %v172
        %v229 = vunpack.c.l.b16 %v173
        %v230 = vunpack.c.l.b16 %v174
        %v231 = vunpack.c.l.b16 %v175
        %v232 = vunpack.c.l.b16 %v176
        %v233 = vunpack.c.l.b16 %v177
        %v234 = vunpack.c.l.b16 %v178
        %v235 = vunpack.c.l.b16 %v179
        %v236 = vunpack.c.l.b16 %v180
        %v237 = vunpack.c.l.b16 %v181
        %v238 = vunpack.c.l.b16 %v182
        %v239 = vunpack.c.l.b16 %v183
        %v240 = vunpack.c.l.b16 %v184
        %v241 = vunpack.c.l.b16 %v185
        %v242 = vunpack.c.l.b16 %v186
        %v243 = vunpack.c.l.b16 %v187
        %v244 = vunpack.c.l.b16 %v188
        %v245 = vunpack.c.l.b16 %v189
        %v246 = vunpack.c.l.b16 %v190
        %v247 = vunpack.c.l.b16 %v191
        %v248 = vunpack.c.l.b16 %v192
        %v249 = vunpack.c.l.b16 %v193
        %v250 = vunpack.c.l.b16 %v194
        %v251 = vunpack.c.l.b16 %v195
        %v252 = vunpack.c.l.b16 %v196
        %v253 = vunpack.c.l.b16 %v197
        %v254 = vpack.c.b16 %v227, %v226
        %v255 = vpack.c.b16 %v229, %v228
        %v256 = vpack.c.b16 %v231, %v230
        %v257 = vpack.c.b16 %v233, %v232
        %v258 = vpack.c.b16 %v235, %v234
        %v259 = vpack.c.b16 %v237, %v236
        %v260 = vpack.c.b16 %v239, %v238
        %v261 = vpack.c.b16 %v241, %v240
        %v262 = vpack.c.b16 %v243, %v242
        %v263 = vpack.c.b16 %v245, %v244
        %v264 = vpack.c.b16 %v247, %v246
        %v265 = vpack.c.b16 %v249, %v248
        %v266 = vpack.c.b16 %v251, %v250
        %v267 = vpack.c.b16 %v253, %v252
        %vm282 = vcmask 31744
        %283 = vst.msk [vmem:[#allocation2] sm:$0xff] %vm282, %v254
        %284 = vst.msk [vmem:[#allocation2 + $0x8] sm:$0xff] %vm282, %v255
        %285 = vst.msk [vmem:[#allocation2 + $0x10] sm:$0xff] %vm282, %v256
        %286 = vst.msk [vmem:[#allocation2 + $0x18] sm:$0xff] %vm282, %v257
        %287 = vst.msk [vmem:[#allocation2 + $0x20] sm:$0xff] %vm282, %v258
        %288 = vst.msk [vmem:[#allocation2 + $0x28] sm:$0xff] %vm282, %v259
        %289 = vst.msk [vmem:[#allocation2 + $0x30] sm:$0xff] %vm282, %v260
        %290 = vst.msk [vmem:[#allocation2 + $0x38] sm:$0xff] %vm282, %v261
        %291 = vst.msk [vmem:[#allocation2 + $0x40] sm:$0xff] %vm282, %v262
        %292 = vst.msk [vmem:[#allocation2 + $0x48] sm:$0xff] %vm282, %v263
        %293 = vst.msk [vmem:[#allocation2 + $0x50] sm:$0xff] %vm282, %v264
        %294 = vst.msk [vmem:[#allocation2 + $0x58] sm:$0xff] %vm282, %v265
        %295 = vst.msk [vmem:[#allocation2 + $0x60] sm:$0xff] %vm282, %v266
        %296 = vst.msk [vmem:[#allocation2 + $0x68] sm:$0xff] %vm282, %v267
        %v297 = vld [vmem:[%s168] sm:$0xf]
        %v298 = vld [vmem:[%s168 + $0x4] sm:$0xf]
        %v299 = vld [vmem:[%s168 + $0x8] sm:$0x1]
        %v300 = vld [vmem:[%s168 + $0xc] sm:$0xf]
        %v301 = vld [vmem:[%s168 + $0x10] sm:$0xf]
        %v302 = vld [vmem:[%s168 + $0x14] sm:$0x1]
        %v303 = vld [vmem:[%s168 + $0x18] sm:$0xf]
        %v304 = vld [vmem:[%s168 + $0x1c] sm:$0xf]
        %v305 = vld [vmem:[%s168 + $0x20] sm:$0x1]
        %v306 = vld [vmem:[%s168 + $0x24] sm:$0xf]
        %v307 = vld [vmem:[%s168 + $0x28] sm:$0xf]
        %v308 = vld [vmem:[%s168 + $0x2c] sm:$0x1]
        %v309 = vld [vmem:[%s168 + $0x30] sm:$0xf]
        %v310 = vld [vmem:[%s168 + $0x34] sm:$0xf]
        %v311 = vld [vmem:[%s168 + $0x38] sm:$0x1]
        %v312 = vld [vmem:[%s168 + $0x3c] sm:$0xf]
        %v313 = vld [vmem:[%s168 + $0x40] sm:$0xf]
        %v314 = vld [vmem:[%s168 + $0x44] sm:$0x1]
        %v315 = vld [vmem:[%s168 + $0x48] sm:$0xf]
        %v316 = vld [vmem:[%s168 + $0x4c] sm:$0xf]
        %v317 = vld [vmem:[%s168 + $0x50] sm:$0x1]
        %v318 = vld [vmem:[%s168 + $0x54] sm:$0xf]
        %v319 = vld [vmem:[%s168 + $0x58] sm:$0xf]
        %v320 = vld [vmem:[%s168 + $0x5c] sm:$0x1]
        %v321 = vld [vmem:[%s168 + $0x60] sm:$0xf]
        %v322 = vld [vmem:[%s168 + $0x64] sm:$0xf]
        %v323 = vld [vmem:[%s168 + $0x68] sm:$0x1]
        %v324 = vld [vmem:[%s168 + $0x6c] sm:$0xf]
        %v325 = vld [vmem:[%s168 + $0x70] sm:$0xf]
        %v326 = vld [vmem:[%s168 + $0x74] sm:$0x1]
        %v327 = vld [vmem:[%s168 + $0x78] sm:$0xf]
        %v328 = vld [vmem:[%s168 + $0x7c] sm:$0xf]
        %v329 = vld [vmem:[%s168 + $0x80] sm:$0x1]
        %v330 = vld [vmem:[%s168 + $0x84] sm:$0xf]
        %v331 = vld [vmem:[%s168 + $0x88] sm:$0xf]
        %v332 = vld [vmem:[%s168 + $0x8c] sm:$0x1]
        %v333 = vld [vmem:[%s168 + $0x90] sm:$0xf]
        %v334 = vld [vmem:[%s168 + $0x94] sm:$0xf]
        %v335 = vld [vmem:[%s168 + $0x98] sm:$0x1]
        %v336 = vld [vmem:[%s168 + $0x9c] sm:$0xf]
        %v337 = vld [vmem:[%s168 + $0xa0] sm:$0xf]
        %v338 = vld [vmem:[%s168 + $0xa4] sm:$0x1]
        %v381 = vunpack.c.l.b16 %v297
        %v382 = vunpack.c.l.b16 %v298
        %v383 = vunpack.c.l.b16 %v299
        %v384 = vunpack.c.l.b16 %v300
        %v385 = vunpack.c.l.b16 %v301
        %v386 = vunpack.c.l.b16 %v302
        %v387 = vunpack.c.l.b16 %v303
        %v388 = vunpack.c.l.b16 %v304
        %v389 = vunpack.c.l.b16 %v305
        %v390 = vunpack.c.l.b16 %v306
        %v391 = vunpack.c.l.b16 %v307
        %v392 = vunpack.c.l.b16 %v308
        %v393 = vunpack.c.l.b16 %v309
        %v394 = vunpack.c.l.b16 %v310
        %v395 = vunpack.c.l.b16 %v311
        %v396 = vunpack.c.l.b16 %v312
        %v397 = vunpack.c.l.b16 %v313
        %v398 = vunpack.c.l.b16 %v314
        %v399 = vunpack.c.l.b16 %v315
        %v400 = vunpack.c.l.b16 %v316
        %v401 = vunpack.c.l.b16 %v317
        %v402 = vunpack.c.l.b16 %v318
        %v403 = vunpack.c.l.b16 %v319
        %v404 = vunpack.c.l.b16 %v320
        %v405 = vunpack.c.l.b16 %v321
        %v406 = vunpack.c.l.b16 %v322
        %v407 = vunpack.c.l.b16 %v323
        %v408 = vunpack.c.l.b16 %v324
        %v409 = vunpack.c.l.b16 %v325
        %v410 = vunpack.c.l.b16 %v326
        %v411 = vunpack.c.l.b16 %v327
        %v412 = vunpack.c.l.b16 %v328
        %v413 = vunpack.c.l.b16 %v329
        %v414 = vunpack.c.l.b16 %v330
        %v415 = vunpack.c.l.b16 %v331
        %v416 = vunpack.c.l.b16 %v332
        %v417 = vunpack.c.l.b16 %v333
        %v418 = vunpack.c.l.b16 %v334
        %v419 = vunpack.c.l.b16 %v335
        %v420 = vunpack.c.l.b16 %v336
        %v421 = vunpack.c.l.b16 %v337
        %v422 = vunpack.c.l.b16 %v338
        %v423 = vpack.c.b16 %v382, %v381
        %v424 = vpack.c.b16 %v383, %v383
        %v425 = vpack.c.b16 %v385, %v384
        %v426 = vpack.c.b16 %v386, %v386
        %v427 = vpack.c.b16 %v388, %v387
        %v428 = vpack.c.b16 %v389, %v389
        %v429 = vpack.c.b16 %v391, %v390
        %v430 = vpack.c.b16 %v392, %v392
        %v431 = vpack.c.b16 %v394, %v393
        %v432 = vpack.c.b16 %v395, %v395
        %v433 = vpack.c.b16 %v397, %v396
        %v434 = vpack.c.b16 %v398, %v398
        %v435 = vpack.c.b16 %v400, %v399
        %v436 = vpack.c.b16 %v401, %v401
        %v437 = vpack.c.b16 %v403, %v402
        %v438 = vpack.c.b16 %v404, %v404
        %v439 = vpack.c.b16 %v406, %v405
        %v440 = vpack.c.b16 %v407, %v407
        %v441 = vpack.c.b16 %v409, %v408
        %v442 = vpack.c.b16 %v410, %v410
        %v443 = vpack.c.b16 %v412, %v411
        %v444 = vpack.c.b16 %v413, %v413
        %v445 = vpack.c.b16 %v415, %v414
        %v446 = vpack.c.b16 %v416, %v416
        %v447 = vpack.c.b16 %v418, %v417
        %v448 = vpack.c.b16 %v419, %v419
        %v449 = vpack.c.b16 %v421, %v420
        %v450 = vpack.c.b16 %v422, %v422
        %vm451 = vsmask.f32 7424
        %v453 = vshrl.u32 %v423, 16
        %v455 = vshll.u32 %v423, 16
        %v457 = vrot.slane %v455, 1
        %v458 = vor.u32 %v453, %v457
        %v460 = vshll.u32 %v424, 16
        %v462 = vrot.slane %v460, 1
        %v463 = vsel %vm451, %v458, %v462
        %v465 = vshrl.u32 %v425, 16
        %v467 = vshll.u32 %v425, 16
        %v469 = vrot.slane %v467, 1
        %v470 = vor.u32 %v465, %v469
        %v472 = vshll.u32 %v426, 16
        %v474 = vrot.slane %v472, 1
        %v475 = vsel %vm451, %v470, %v474
        %v477 = vshrl.u32 %v427, 16
        %v479 = vshll.u32 %v427, 16
        %v481 = vrot.slane %v479, 1
        %v482 = vor.u32 %v477, %v481
        %v484 = vshll.u32 %v428, 16
        %v486 = vrot.slane %v484, 1
        %v487 = vsel %vm451, %v482, %v486
        %v489 = vshrl.u32 %v429, 16
        %v491 = vshll.u32 %v429, 16
        %v493 = vrot.slane %v491, 1
        %v494 = vor.u32 %v489, %v493
        %v496 = vshll.u32 %v430, 16
        %v498 = vrot.slane %v496, 1
        %v499 = vsel %vm451, %v494, %v498
        %v501 = vshrl.u32 %v431, 16
        %v503 = vshll.u32 %v431, 16
        %v505 = vrot.slane %v503, 1
        %v506 = vor.u32 %v501, %v505
        %v508 = vshll.u32 %v432, 16
        %v510 = vrot.slane %v508, 1
        %v511 = vsel %vm451, %v506, %v510
        %v513 = vshrl.u32 %v433, 16
        %v515 = vshll.u32 %v433, 16
        %v517 = vrot.slane %v515, 1
        %v518 = vor.u32 %v513, %v517
        %v520 = vshll.u32 %v434, 16
        %v522 = vrot.slane %v520, 1
        %v523 = vsel %vm451, %v518, %v522
        %v525 = vshrl.u32 %v435, 16
        %v527 = vshll.u32 %v435, 16
        %v529 = vrot.slane %v527, 1
        %v530 = vor.u32 %v525, %v529
        %v532 = vshll.u32 %v436, 16
        %v534 = vrot.slane %v532, 1
        %v535 = vsel %vm451, %v530, %v534
        %v537 = vshrl.u32 %v437, 16
        %v539 = vshll.u32 %v437, 16
        %v541 = vrot.slane %v539, 1
        %v542 = vor.u32 %v537, %v541
        %v544 = vshll.u32 %v438, 16
        %v546 = vrot.slane %v544, 1
        %v547 = vsel %vm451, %v542, %v546
        %v549 = vshrl.u32 %v439, 16
        %v551 = vshll.u32 %v439, 16
        %v553 = vrot.slane %v551, 1
        %v554 = vor.u32 %v549, %v553
        %v556 = vshll.u32 %v440, 16
        %v558 = vrot.slane %v556, 1
        %v559 = vsel %vm451, %v554, %v558
        %v561 = vshrl.u32 %v441, 16
        %v563 = vshll.u32 %v441, 16
        %v565 = vrot.slane %v563, 1
        %v566 = vor.u32 %v561, %v565
        %v568 = vshll.u32 %v442, 16
        %v570 = vrot.slane %v568, 1
        %v571 = vsel %vm451, %v566, %v570
        %v573 = vshrl.u32 %v443, 16
        %v575 = vshll.u32 %v443, 16
        %v577 = vrot.slane %v575, 1
        %v578 = vor.u32 %v573, %v577
        %v580 = vshll.u32 %v444, 16
        %v582 = vrot.slane %v580, 1
        %v583 = vsel %vm451, %v578, %v582
        %v585 = vshrl.u32 %v445, 16
        %v587 = vshll.u32 %v445, 16
        %v589 = vrot.slane %v587, 1
        %v590 = vor.u32 %v585, %v589
        %v592 = vshll.u32 %v446, 16
        %v594 = vrot.slane %v592, 1
        %v595 = vsel %vm451, %v590, %v594
        %v597 = vshrl.u32 %v447, 16
        %v599 = vshll.u32 %v447, 16
        %v601 = vrot.slane %v599, 1
        %v602 = vor.u32 %v597, %v601
        %v604 = vshll.u32 %v448, 16
        %v606 = vrot.slane %v604, 1
        %v607 = vsel %vm451, %v602, %v606
        %v609 = vshrl.u32 %v449, 16
        %v611 = vshll.u32 %v449, 16
        %v613 = vrot.slane %v611, 1
        %v614 = vor.u32 %v609, %v613
        %v616 = vshll.u32 %v450, 16
        %v618 = vrot.slane %v616, 1
        %v619 = vsel %vm451, %v614, %v618
        %620 = vrot.lane.b32.xlu0 %v463, 4
        %v621 = vpop.permute.xlu0 %620
        %622 = vrot.lane.b32.xlu0 %v475, 4
        %v623 = vpop.permute.xlu0 %622
        %624 = vrot.lane.b32.xlu0 %v487, 4
        %v625 = vpop.permute.xlu0 %624
        %626 = vrot.lane.b32.xlu0 %v499, 4
        %v627 = vpop.permute.xlu0 %626
        %628 = vrot.lane.b32.xlu0 %v511, 4
        %v629 = vpop.permute.xlu0 %628
        %630 = vrot.lane.b32.xlu0 %v523, 4
        %v631 = vpop.permute.xlu0 %630
        %632 = vrot.lane.b32.xlu0 %v535, 4
        %v633 = vpop.permute.xlu0 %632
        %634 = vrot.lane.b32.xlu0 %v547, 4
        %v635 = vpop.permute.xlu0 %634
        %636 = vrot.lane.b32.xlu0 %v559, 4
        %v637 = vpop.permute.xlu0 %636
        %638 = vrot.lane.b32.xlu0 %v571, 4
        %v639 = vpop.permute.xlu0 %638
        %640 = vrot.lane.b32.xlu0 %v583, 4
        %v641 = vpop.permute.xlu0 %640
        %642 = vrot.lane.b32.xlu0 %v595, 4
        %v643 = vpop.permute.xlu0 %642
        %644 = vrot.lane.b32.xlu0 %v607, 4
        %v645 = vpop.permute.xlu0 %644
        %646 = vrot.lane.b32.xlu0 %v619, 4
        %v647 = vpop.permute.xlu0 %646
        %vm662 = vcmask 64544
        %663 = vst.msk [vmem:[#allocation2] sm:$0xff] %vm662, %v621
        %664 = vst.msk [vmem:[#allocation2 + $0x8] sm:$0xff] %vm662, %v623
        %665 = vst.msk [vmem:[#allocation2 + $0x10] sm:$0xff] %vm662, %v625
        %666 = vst.msk [vmem:[#allocation2 + $0x18] sm:$0xff] %vm662, %v627
        %667 = vst.msk [vmem:[#allocation2 + $0x20] sm:$0xff] %vm662, %v629
        %668 = vst.msk [vmem:[#allocation2 + $0x28] sm:$0xff] %vm662, %v631
        %669 = vst.msk [vmem:[#allocation2 + $0x30] sm:$0xff] %vm662, %v633
        %670 = vst.msk [vmem:[#allocation2 + $0x38] sm:$0xff] %vm662, %v635
        %671 = vst.msk [vmem:[#allocation2 + $0x40] sm:$0xff] %vm662, %v637
        %672 = vst.msk [vmem:[#allocation2 + $0x48] sm:$0xff] %vm662, %v639
        %673 = vst.msk [vmem:[#allocation2 + $0x50] sm:$0xff] %vm662, %v641
        %674 = vst.msk [vmem:[#allocation2 + $0x58] sm:$0xff] %vm662, %v643
        %675 = vst.msk [vmem:[#allocation2 + $0x60] sm:$0xff] %vm662, %v645
        %676 = vst.msk [vmem:[#allocation2 + $0x68] sm:$0xff] %vm662, %v647
        %v677 = vld [vmem:[%s168] sm:$0xe]
        %v678 = vld [vmem:[%s168 + $0x4] sm:$0xf]
        %v679 = vld [vmem:[%s168 + $0x8] sm:$0x1]
        %v680 = vld [vmem:[%s168 + $0xc] sm:$0xe]
        %v681 = vld [vmem:[%s168 + $0x10] sm:$0xf]
        %v682 = vld [vmem:[%s168 + $0x14] sm:$0x1]
        %v683 = vld [vmem:[%s168 + $0x18] sm:$0xe]
        %v684 = vld [vmem:[%s168 + $0x1c] sm:$0xf]
        %v685 = vld [vmem:[%s168 + $0x20] sm:$0x1]
        %v686 = vld [vmem:[%s168 + $0x24] sm:$0xe]
        %v687 = vld [vmem:[%s168 + $0x28] sm:$0xf]
        %v688 = vld [vmem:[%s168 + $0x2c] sm:$0x1]
        %v689 = vld [vmem:[%s168 + $0x30] sm:$0xe]
        %v690 = vld [vmem:[%s168 + $0x34] sm:$0xf]
        %v691 = vld [vmem:[%s168 + $0x38] sm:$0x1]
        %v692 = vld [vmem:[%s168 + $0x3c] sm:$0xe]
        %v693 = vld [vmem:[%s168 + $0x40] sm:$0xf]
        %v694 = vld [vmem:[%s168 + $0x44] sm:$0x1]
        %v695 = vld [vmem:[%s168 + $0x48] sm:$0xe]
        %v696 = vld [vmem:[%s168 + $0x4c] sm:$0xf]
        %v697 = vld [vmem:[%s168 + $0x50] sm:$0x1]
        %v698 = vld [vmem:[%s168 + $0x54] sm:$0xe]
        %v699 = vld [vmem:[%s168 + $0x58] sm:$0xf]
        %v700 = vld [vmem:[%s168 + $0x5c] sm:$0x1]
        %v701 = vld [vmem:[%s168 + $0x60] sm:$0xe]
        %v702 = vld [vmem:[%s168 + $0x64] sm:$0xf]
        %v703 = vld [vmem:[%s168 + $0x68] sm:$0x1]
        %v704 = vld [vmem:[%s168 + $0x6c] sm:$0xe]
        %v705 = vld [vmem:[%s168 + $0x70] sm:$0xf]
        %v706 = vld [vmem:[%s168 + $0x74] sm:$0x1]
        %v707 = vld [vmem:[%s168 + $0x78] sm:$0xe]
        %v708 = vld [vmem:[%s168 + $0x7c] sm:$0xf]
        %v709 = vld [vmem:[%s168 + $0x80] sm:$0x1]
        %v710 = vld [vmem:[%s168 + $0x84] sm:$0xe]
        %v711 = vld [vmem:[%s168 + $0x88] sm:$0xf]
        %v712 = vld [vmem:[%s168 + $0x8c] sm:$0x1]
        %v713 = vld [vmem:[%s168 + $0x90] sm:$0xe]
        %v714 = vld [vmem:[%s168 + $0x94] sm:$0xf]
        %v715 = vld [vmem:[%s168 + $0x98] sm:$0x1]
        %v716 = vld [vmem:[%s168 + $0x9c] sm:$0xe]
        %v717 = vld [vmem:[%s168 + $0xa0] sm:$0xf]
        %v718 = vld [vmem:[%s168 + $0xa4] sm:$0x1]
        %v761 = vunpack.c.l.b16 %v677
        %v762 = vunpack.c.l.b16 %v678
        %v763 = vunpack.c.l.b16 %v679
        %v764 = vunpack.c.l.b16 %v680
        %v765 = vunpack.c.l.b16 %v681
        %v766 = vunpack.c.l.b16 %v682
        %v767 = vunpack.c.l.b16 %v683
        %v768 = vunpack.c.l.b16 %v684
        %v769 = vunpack.c.l.b16 %v685
        %v770 = vunpack.c.l.b16 %v686
        %v771 = vunpack.c.l.b16 %v687
        %v772 = vunpack.c.l.b16 %v688
        %v773 = vunpack.c.l.b16 %v689
        %v774 = vunpack.c.l.b16 %v690
        %v775 = vunpack.c.l.b16 %v691
        %v776 = vunpack.c.l.b16 %v692
        %v777 = vunpack.c.l.b16 %v693
        %v778 = vunpack.c.l.b16 %v694
        %v779 = vunpack.c.l.b16 %v695
        %v780 = vunpack.c.l.b16 %v696
        %v781 = vunpack.c.l.b16 %v697
        %v782 = vunpack.c.l.b16 %v698
        %v783 = vunpack.c.l.b16 %v699
        %v784 = vunpack.c.l.b16 %v700
        %v785 = vunpack.c.l.b16 %v701
        %v786 = vunpack.c.l.b16 %v702
        %v787 = vunpack.c.l.b16 %v703
        %v788 = vunpack.c.l.b16 %v704
        %v789 = vunpack.c.l.b16 %v705
        %v790 = vunpack.c.l.b16 %v706
        %v791 = vunpack.c.l.b16 %v707
        %v792 = vunpack.c.l.b16 %v708
        %v793 = vunpack.c.l.b16 %v709
        %v794 = vunpack.c.l.b16 %v710
        %v795 = vunpack.c.l.b16 %v711
        %v796 = vunpack.c.l.b16 %v712
        %v797 = vunpack.c.l.b16 %v713
        %v798 = vunpack.c.l.b16 %v714
        %v799 = vunpack.c.l.b16 %v715
        %v800 = vunpack.c.l.b16 %v716
        %v801 = vunpack.c.l.b16 %v717
        %v802 = vunpack.c.l.b16 %v718
        %v803 = vpack.c.b16 %v762, %v761
        %v804 = vpack.c.b16 %v763, %v763
        %v805 = vpack.c.b16 %v765, %v764
        %v806 = vpack.c.b16 %v766, %v766
        %v807 = vpack.c.b16 %v768, %v767
        %v808 = vpack.c.b16 %v769, %v769
        %v809 = vpack.c.b16 %v771, %v770
        %v810 = vpack.c.b16 %v772, %v772
        %v811 = vpack.c.b16 %v774, %v773
        %v812 = vpack.c.b16 %v775, %v775
        %v813 = vpack.c.b16 %v777, %v776
        %v814 = vpack.c.b16 %v778, %v778
        %v815 = vpack.c.b16 %v780, %v779
        %v816 = vpack.c.b16 %v781, %v781
        %v817 = vpack.c.b16 %v783, %v782
        %v818 = vpack.c.b16 %v784, %v784
        %v819 = vpack.c.b16 %v786, %v785
        %v820 = vpack.c.b16 %v787, %v787
        %v821 = vpack.c.b16 %v789, %v788
        %v822 = vpack.c.b16 %v790, %v790
        %v823 = vpack.c.b16 %v792, %v791
        %v824 = vpack.c.b16 %v793, %v793
        %v825 = vpack.c.b16 %v795, %v794
        %v826 = vpack.c.b16 %v796, %v796
        %v827 = vpack.c.b16 %v798, %v797
        %v828 = vpack.c.b16 %v799, %v799
        %v829 = vpack.c.b16 %v801, %v800
        %v830 = vpack.c.b16 %v802, %v802
        %vm831 = vcmask 1046528
        %v832 = vrot.slane %v803, 1
        %v833 = vrot.slane %v804, 1
        %v834 = vsel %vm831, %v832, %v833
        %v835 = vrot.slane %v805, 1
        %v836 = vrot.slane %v806, 1
        %v837 = vsel %vm831, %v835, %v836
        %v838 = vrot.slane %v807, 1
        %v839 = vrot.slane %v808, 1
        %v840 = vsel %vm831, %v838, %v839
        %v841 = vrot.slane %v809, 1
        %v842 = vrot.slane %v810, 1
        %v843 = vsel %vm831, %v841, %v842
        %v844 = vrot.slane %v811, 1
        %v845 = vrot.slane %v812, 1
        %v846 = vsel %vm831, %v844, %v845
        %v847 = vrot.slane %v813, 1
        %v848 = vrot.slane %v814, 1
        %v849 = vsel %vm831, %v847, %v848
        %v850 = vrot.slane %v815, 1
        %v851 = vrot.slane %v816, 1
        %v852 = vsel %vm831, %v850, %v851
        %v853 = vrot.slane %v817, 1
        %v854 = vrot.slane %v818, 1
        %v855 = vsel %vm831, %v853, %v854
        %v856 = vrot.slane %v819, 1
        %v857 = vrot.slane %v820, 1
        %v858 = vsel %vm831, %v856, %v857
        %v859 = vrot.slane %v821, 1
        %v860 = vrot.slane %v822, 1
        %v861 = vsel %vm831, %v859, %v860
        %v862 = vrot.slane %v823, 1
        %v863 = vrot.slane %v824, 1
        %v864 = vsel %vm831, %v862, %v863
        %v865 = vrot.slane %v825, 1
        %v866 = vrot.slane %v826, 1
        %v867 = vsel %vm831, %v865, %v866
        %v868 = vrot.slane %v827, 1
        %v869 = vrot.slane %v828, 1
        %v870 = vsel %vm831, %v868, %v869
        %v871 = vrot.slane %v829, 1
        %v872 = vrot.slane %v830, 1
        %v873 = vsel %vm831, %v871, %v872
        %874 = vrot.lane.b32.xlu0 %v834, 8
        %v875 = vpop.permute.xlu0 %874
        %876 = vrot.lane.b32.xlu0 %v837, 8
        %v877 = vpop.permute.xlu0 %876
        %878 = vrot.lane.b32.xlu0 %v840, 8
        %v879 = vpop.permute.xlu0 %878
        %880 = vrot.lane.b32.xlu0 %v843, 8
        %v881 = vpop.permute.xlu0 %880
        %882 = vrot.lane.b32.xlu0 %v846, 8
        %v883 = vpop.permute.xlu0 %882
        %884 = vrot.lane.b32.xlu0 %v849, 8
        %v885 = vpop.permute.xlu0 %884
        %886 = vrot.lane.b32.xlu0 %v852, 8
        %v887 = vpop.permute.xlu0 %886
        %888 = vrot.lane.b32.xlu0 %v855, 8
        %v889 = vpop.permute.xlu0 %888
        %890 = vrot.lane.b32.xlu0 %v858, 8
        %v891 = vpop.permute.xlu0 %890
        %892 = vrot.lane.b32.xlu0 %v861, 8
        %v893 = vpop.permute.xlu0 %892
        %894 = vrot.lane.b32.xlu0 %v864, 8
        %v895 = vpop.permute.xlu0 %894
        %896 = vrot.lane.b32.xlu0 %v867, 8
        %v897 = vpop.permute.xlu0 %896
        %898 = vrot.lane.b32.xlu0 %v870, 8
        %v899 = vpop.permute.xlu0 %898
        %900 = vrot.lane.b32.xlu0 %v873, 8
        %v901 = vpop.permute.xlu0 %900
        %vm916 = vcmask 97344
        %917 = vst.msk [vmem:[#allocation2] sm:$0xff] %vm916, %v875
        %918 = vst.msk [vmem:[#allocation2 + $0x8] sm:$0xff] %vm916, %v877
        %919 = vst.msk [vmem:[#allocation2 + $0x10] sm:$0xff] %vm916, %v879
        %920 = vst.msk [vmem:[#allocation2 + $0x18] sm:$0xff] %vm916, %v881
        %921 = vst.msk [vmem:[#allocation2 + $0x20] sm:$0xff] %vm916, %v883
        %922 = vst.msk [vmem:[#allocation2 + $0x28] sm:$0xff] %vm916, %v885
        %923 = vst.msk [vmem:[#allocation2 + $0x30] sm:$0xff] %vm916, %v887
        %924 = vst.msk [vmem:[#allocation2 + $0x38] sm:$0xff] %vm916, %v889
        %925 = vst.msk [vmem:[#allocation2 + $0x40] sm:$0xff] %vm916, %v891
        %926 = vst.msk [vmem:[#allocation2 + $0x48] sm:$0xff] %vm916, %v893
        %927 = vst.msk [vmem:[#allocation2 + $0x50] sm:$0xff] %vm916, %v895
        %928 = vst.msk [vmem:[#allocation2 + $0x58] sm:$0xff] %vm916, %v897
        %929 = vst.msk [vmem:[#allocation2 + $0x60] sm:$0xff] %vm916, %v899
        %930 = vst.msk [vmem:[#allocation2 + $0x68] sm:$0xff] %vm916, %v901
        %s931 = scalar_lea.vmem %s168, 12
        %v932 = vld [vmem:[%s931] sm:$0xf]
        %v933 = vld [vmem:[%s931 + $0x4] sm:$0xf]
        %v934 = vld [vmem:[%s931 + $0xc] sm:$0xf]
        %v935 = vld [vmem:[%s931 + $0x10] sm:$0xf]
        %v936 = vld [vmem:[%s931 + $0x18] sm:$0xf]
        %v937 = vld [vmem:[%s931 + $0x1c] sm:$0xf]
        %v938 = vld [vmem:[%s931 + $0x24] sm:$0xf]
        %v939 = vld [vmem:[%s931 + $0x28] sm:$0xf]
        %v940 = vld [vmem:[%s931 + $0x30] sm:$0xf]
        %v941 = vld [vmem:[%s931 + $0x34] sm:$0xf]
        %v942 = vld [vmem:[%s931 + $0x3c] sm:$0xf]
        %v943 = vld [vmem:[%s931 + $0x40] sm:$0xf]
        %v944 = vld [vmem:[%s931 + $0x48] sm:$0xf]
        %v945 = vld [vmem:[%s931 + $0x4c] sm:$0xf]
        %v946 = vld [vmem:[%s931 + $0x54] sm:$0xf]
        %v947 = vld [vmem:[%s931 + $0x58] sm:$0xf]
        %v948 = vld [vmem:[%s931 + $0x60] sm:$0xf]
        %v949 = vld [vmem:[%s931 + $0x64] sm:$0xf]
        %v950 = vld [vmem:[%s931 + $0x6c] sm:$0xf]
        %v951 = vld [vmem:[%s931 + $0x70] sm:$0xf]
        %v952 = vld [vmem:[%s931 + $0x78] sm:$0xf]
        %v953 = vld [vmem:[%s931 + $0x7c] sm:$0xf]
        %v954 = vld [vmem:[%s931 + $0x84] sm:$0xf]
        %v955 = vld [vmem:[%s931 + $0x88] sm:$0xf]
        %v956 = vld [vmem:[%s931 + $0x90] sm:$0xf]
        %v957 = vld [vmem:[%s931 + $0x94] sm:$0xf]
        %v958 = vld [vmem:[%s931 + $0x9c] sm:$0xf]
        %v959 = vld [vmem:[%s931 + $0xa0] sm:$0xf]
        %v988 = vunpack.c.l.b16 %v932
        %v989 = vunpack.c.l.b16 %v933
        %v990 = vunpack.c.l.b16 %v934
        %v991 = vunpack.c.l.b16 %v935
        %v992 = vunpack.c.l.b16 %v936
        %v993 = vunpack.c.l.b16 %v937
        %v994 = vunpack.c.l.b16 %v938
        %v995 = vunpack.c.l.b16 %v939
        %v996 = vunpack.c.l.b16 %v940
        %v997 = vunpack.c.l.b16 %v941
        %v998 = vunpack.c.l.b16 %v942
        %v999 = vunpack.c.l.b16 %v943
        %v1000 = vunpack.c.l.b16 %v944
        %v1001 = vunpack.c.l.b16 %v945
        %v1002 = vunpack.c.l.b16 %v946
        %v1003 = vunpack.c.l.b16 %v947
        %v1004 = vunpack.c.l.b16 %v948
        %v1005 = vunpack.c.l.b16 %v949
        %v1006 = vunpack.c.l.b16 %v950
        %v1007 = vunpack.c.l.b16 %v951
        %v1008 = vunpack.c.l.b16 %v952
        %v1009 = vunpack.c.l.b16 %v953
        %v1010 = vunpack.c.l.b16 %v954
        %v1011 = vunpack.c.l.b16 %v955
        %v1012 = vunpack.c.l.b16 %v956
        %v1013 = vunpack.c.l.b16 %v957
        %v1014 = vunpack.c.l.b16 %v958
        %v1015 = vunpack.c.l.b16 %v959
        %v1016 = vpack.c.b16 %v989, %v988
        %v1017 = vpack.c.b16 %v991, %v990
        %v1018 = vpack.c.b16 %v993, %v992
        %v1019 = vpack.c.b16 %v995, %v994
        %v1020 = vpack.c.b16 %v997, %v996
        %v1021 = vpack.c.b16 %v999, %v998
        %v1022 = vpack.c.b16 %v1001, %v1000
        %v1023 = vpack.c.b16 %v1003, %v1002
        %v1024 = vpack.c.b16 %v1005, %v1004
        %v1025 = vpack.c.b16 %v1007, %v1006
        %v1026 = vpack.c.b16 %v1009, %v1008
        %v1027 = vpack.c.b16 %v1011, %v1010
        %v1028 = vpack.c.b16 %v1013, %v1012
        %v1029 = vpack.c.b16 %v1015, %v1014
        %1030 = vrot.lane.b32.xlu0 %v1016, 12
        %v1031 = vpop.permute.xlu0 %1030
        %1032 = vrot.lane.b32.xlu0 %v1017, 12
        %v1033 = vpop.permute.xlu0 %1032
        %1034 = vrot.lane.b32.xlu0 %v1018, 12
        %v1035 = vpop.permute.xlu0 %1034
        %1036 = vrot.lane.b32.xlu0 %v1019, 12
        %v1037 = vpop.permute.xlu0 %1036
        %1038 = vrot.lane.b32.xlu0 %v1020, 12
        %v1039 = vpop.permute.xlu0 %1038
        %1040 = vrot.lane.b32.xlu0 %v1021, 12
        %v1041 = vpop.permute.xlu0 %1040
        %1042 = vrot.lane.b32.xlu0 %v1022, 12
        %v1043 = vpop.permute.xlu0 %1042
        %1044 = vrot.lane.b32.xlu0 %v1023, 12
        %v1045 = vpop.permute.xlu0 %1044
        %1046 = vrot.lane.b32.xlu0 %v1024, 12
        %v1047 = vpop.permute.xlu0 %1046
        %1048 = vrot.lane.b32.xlu0 %v1025, 12
        %v1049 = vpop.permute.xlu0 %1048
        %1050 = vrot.lane.b32.xlu0 %v1026, 12
        %v1051 = vpop.permute.xlu0 %1050
        %1052 = vrot.lane.b32.xlu0 %v1027, 12
        %v1053 = vpop.permute.xlu0 %1052
        %1054 = vrot.lane.b32.xlu0 %v1028, 12
        %v1055 = vpop.permute.xlu0 %1054
        %1056 = vrot.lane.b32.xlu0 %v1029, 12
        %v1057 = vpop.permute.xlu0 %1056
        %vm1072 = vcmask 130144
        %1073 = vst.msk [vmem:[#allocation2] sm:$0xff] %vm1072, %v1031
        %1074 = vst.msk [vmem:[#allocation2 + $0x8] sm:$0xff] %vm1072, %v1033
        %1075 = vst.msk [vmem:[#allocation2 + $0x10] sm:$0xff] %vm1072, %v1035
        %1076 = vst.msk [vmem:[#allocation2 + $0x18] sm:$0xff] %vm1072, %v1037
        %1077 = vst.msk [vmem:[#allocation2 + $0x20] sm:$0xff] %vm1072, %v1039
        %1078 = vst.msk [vmem:[#allocation2 + $0x28] sm:$0xff] %vm1072, %v1041
        %1079 = vst.msk [vmem:[#allocation2 + $0x30] sm:$0xff] %vm1072, %v1043
        %1080 = vst.msk [vmem:[#allocation2 + $0x38] sm:$0xff] %vm1072, %v1045
        %1081 = vst.msk [vmem:[#allocation2 + $0x40] sm:$0xff] %vm1072, %v1047
        %1082 = vst.msk [vmem:[#allocation2 + $0x48] sm:$0xff] %vm1072, %v1049
        %1083 = vst.msk [vmem:[#allocation2 + $0x50] sm:$0xff] %vm1072, %v1051
        %1084 = vst.msk [vmem:[#allocation2 + $0x58] sm:$0xff] %vm1072, %v1053
        %1085 = vst.msk [vmem:[#allocation2 + $0x60] sm:$0xff] %vm1072, %v1055
        %1086 = vst.msk [vmem:[#allocation2 + $0x68] sm:$0xff] %vm1072, %v1057
        %v1087 = vld [vmem:[%s931] sm:$0xf]
        %v1088 = vld [vmem:[%s931 + $0x4] sm:$0xf]
        %v1089 = vld [vmem:[%s931 + $0x8] sm:$0x1]
        %v1090 = vld [vmem:[%s931 + $0xc] sm:$0xf]
        %v1091 = vld [vmem:[%s931 + $0x10] sm:$0xf]
        %v1092 = vld [vmem:[%s931 + $0x14] sm:$0x1]
        %v1093 = vld [vmem:[%s931 + $0x18] sm:$0xf]
        %v1094 = vld [vmem:[%s931 + $0x1c] sm:$0xf]
        %v1095 = vld [vmem:[%s931 + $0x20] sm:$0x1]
        %v1096 = vld [vmem:[%s931 + $0x24] sm:$0xf]
        %v1097 = vld [vmem:[%s931 + $0x28] sm:$0xf]
        %v1098 = vld [vmem:[%s931 + $0x2c] sm:$0x1]
        %v1099 = vld [vmem:[%s931 + $0x30] sm:$0xf]
        %v1100 = vld [vmem:[%s931 + $0x34] sm:$0xf]
        %v1101 = vld [vmem:[%s931 + $0x38] sm:$0x1]
        %v1102 = vld [vmem:[%s931 + $0x3c] sm:$0xf]
        %v1103 = vld [vmem:[%s931 + $0x40] sm:$0xf]
        %v1104 = vld [vmem:[%s931 + $0x44] sm:$0x1]
        %v1105 = vld [vmem:[%s931 + $0x48] sm:$0xf]
        %v1106 = vld [vmem:[%s931 + $0x4c] sm:$0xf]
        %v1107 = vld [vmem:[%s931 + $0x50] sm:$0x1]
        %v1108 = vld [vmem:[%s931 + $0x54] sm:$0xf]
        %v1109 = vld [vmem:[%s931 + $0x58] sm:$0xf]
        %v1110 = vld [vmem:[%s931 + $0x5c] sm:$0x1]
        %v1111 = vld [vmem:[%s931 + $0x60] sm:$0xf]
        %v1112 = vld [vmem:[%s931 + $0x64] sm:$0xf]
        %v1113 = vld [vmem:[%s931 + $0x68] sm:$0x1]
        %v1114 = vld [vmem:[%s931 + $0x6c] sm:$0xf]
        %v1115 = vld [vmem:[%s931 + $0x70] sm:$0xf]
        %v1116 = vld [vmem:[%s931 + $0x74] sm:$0x1]
        %v1117 = vld [vmem:[%s931 + $0x78] sm:$0xf]
        %v1118 = vld [vmem:[%s931 + $0x7c] sm:$0xf]
        %v1119 = vld [vmem:[%s931 + $0x80] sm:$0x1]
        %v1120 = vld [vmem:[%s931 + $0x84] sm:$0xf]
        %v1121 = vld [vmem:[%s931 + $0x88] sm:$0xf]
        %v1122 = vld [vmem:[%s931 + $0x8c] sm:$0x1]
        %v1123 = vld [vmem:[%s931 + $0x90] sm:$0xf]
        %v1124 = vld [vmem:[%s931 + $0x94] sm:$0xf]
        %v1125 = vld [vmem:[%s931 + $0x98] sm:$0x1]
        %v1126 = vld [vmem:[%s931 + $0x9c] sm:$0xf]
        %v1127 = vld [vmem:[%s931 + $0xa0] sm:$0xf]
        %v1128 = vld [vmem:[%s931 + $0xa4] sm:$0x1]
        %v1171 = vunpack.c.l.b16 %v1087
        %v1172 = vunpack.c.l.b16 %v1088
        %v1173 = vunpack.c.l.b16 %v1089
        %v1174 = vunpack.c.l.b16 %v1090
        %v1175 = vunpack.c.l.b16 %v1091
        %v1176 = vunpack.c.l.b16 %v1092
        %v1177 = vunpack.c.l.b16 %v1093
        %v1178 = vunpack.c.l.b16 %v1094
        %v1179 = vunpack.c.l.b16 %v1095
        %v1180 = vunpack.c.l.b16 %v1096
        %v1181 = vunpack.c.l.b16 %v1097
        %v1182 = vunpack.c.l.b16 %v1098
        %v1183 = vunpack.c.l.b16 %v1099
        %v1184 = vunpack.c.l.b16 %v1100
        %v1185 = vunpack.c.l.b16 %v1101
        %v1186 = vunpack.c.l.b16 %v1102
        %v1187 = vunpack.c.l.b16 %v1103
        %v1188 = vunpack.c.l.b16 %v1104
        %v1189 = vunpack.c.l.b16 %v1105
        %v1190 = vunpack.c.l.b16 %v1106
        %v1191 = vunpack.c.l.b16 %v1107
        %v1192 = vunpack.c.l.b16 %v1108
        %v1193 = vunpack.c.l.b16 %v1109
        %v1194 = vunpack.c.l.b16 %v1110
        %v1195 = vunpack.c.l.b16 %v1111
        %v1196 = vunpack.c.l.b16 %v1112
        %v1197 = vunpack.c.l.b16 %v1113
        %v1198 = vunpack.c.l.b16 %v1114
        %v1199 = vunpack.c.l.b16 %v1115
        %v1200 = vunpack.c.l.b16 %v1116
        %v1201 = vunpack.c.l.b16 %v1117
        %v1202 = vunpack.c.l.b16 %v1118
        %v1203 = vunpack.c.l.b16 %v1119
        %v1204 = vunpack.c.l.b16 %v1120
        %v1205 = vunpack.c.l.b16 %v1121
        %v1206 = vunpack.c.l.b16 %v1122
        %v1207 = vunpack.c.l.b16 %v1123
        %v1208 = vunpack.c.l.b16 %v1124
        %v1209 = vunpack.c.l.b16 %v1125
        %v1210 = vunpack.c.l.b16 %v1126
        %v1211 = vunpack.c.l.b16 %v1127
        %v1212 = vunpack.c.l.b16 %v1128
        %v1213 = vpack.c.b16 %v1172, %v1171
        %v1214 = vpack.c.b16 %v1173, %v1173
        %v1215 = vpack.c.b16 %v1175, %v1174
        %v1216 = vpack.c.b16 %v1176, %v1176
        %v1217 = vpack.c.b16 %v1178, %v1177
        %v1218 = vpack.c.b16 %v1179, %v1179
        %v1219 = vpack.c.b16 %v1181, %v1180
        %v1220 = vpack.c.b16 %v1182, %v1182
        %v1221 = vpack.c.b16 %v1184, %v1183
        %v1222 = vpack.c.b16 %v1185, %v1185
        %v1223 = vpack.c.b16 %v1187, %v1186
        %v1224 = vpack.c.b16 %v1188, %v1188
        %v1225 = vpack.c.b16 %v1190, %v1189
        %v1226 = vpack.c.b16 %v1191, %v1191
        %v1227 = vpack.c.b16 %v1193, %v1192
        %v1228 = vpack.c.b16 %v1194, %v1194
        %v1229 = vpack.c.b16 %v1196, %v1195
        %v1230 = vpack.c.b16 %v1197, %v1197
        %v1231 = vpack.c.b16 %v1199, %v1198
        %v1232 = vpack.c.b16 %v1200, %v1200
        %v1233 = vpack.c.b16 %v1202, %v1201
        %v1234 = vpack.c.b16 %v1203, %v1203
        %v1235 = vpack.c.b16 %v1205, %v1204
        %v1236 = vpack.c.b16 %v1206, %v1206
        %v1237 = vpack.c.b16 %v1208, %v1207
        %v1238 = vpack.c.b16 %v1209, %v1209
        %v1239 = vpack.c.b16 %v1211, %v1210
        %v1240 = vpack.c.b16 %v1212, %v1212
        %v1242 = vshrl.u32 %v1213, 16
        %v1244 = vshll.u32 %v1213, 16
        %v1246 = vrot.slane %v1244, 1
        %v1247 = vor.u32 %v1242, %v1246
        %v1249 = vshll.u32 %v1214, 16
        %v1251 = vrot.slane %v1249, 1
        %v1252 = vsel %vm451, %v1247, %v1251
        %v1254 = vshrl.u32 %v1215, 16
        %v1256 = vshll.u32 %v1215, 16
        %v1258 = vrot.slane %v1256, 1
        %v1259 = vor.u32 %v1254, %v1258
        %v1261 = vshll.u32 %v1216, 16
        %v1263 = vrot.slane %v1261, 1
        %v1264 = vsel %vm451, %v1259, %v1263
        %v1266 = vshrl.u32 %v1217, 16
        %v1268 = vshll.u32 %v1217, 16
        %v1270 = vrot.slane %v1268, 1
        %v1271 = vor.u32 %v1266, %v1270
        %v1273 = vshll.u32 %v1218, 16
        %v1275 = vrot.slane %v1273, 1
        %v1276 = vsel %vm451, %v1271, %v1275
        %v1278 = vshrl.u32 %v1219, 16
        %v1280 = vshll.u32 %v1219, 16
        %v1282 = vrot.slane %v1280, 1
        %v1283 = vor.u32 %v1278, %v1282
        %v1285 = vshll.u32 %v1220, 16
        %v1287 = vrot.slane %v1285, 1
        %v1288 = vsel %vm451, %v1283, %v1287
        %v1290 = vshrl.u32 %v1221, 16
        %v1292 = vshll.u32 %v1221, 16
        %v1294 = vrot.slane %v1292, 1
        %v1295 = vor.u32 %v1290, %v1294
        %v1297 = vshll.u32 %v1222, 16
        %v1299 = vrot.slane %v1297, 1
        %v1300 = vsel %vm451, %v1295, %v1299
        %v1302 = vshrl.u32 %v1223, 16
        %v1304 = vshll.u32 %v1223, 16
        %v1306 = vrot.slane %v1304, 1
        %v1307 = vor.u32 %v1302, %v1306
        %v1309 = vshll.u32 %v1224, 16
        %v1311 = vrot.slane %v1309, 1
        %v1312 = vsel %vm451, %v1307, %v1311
        %v1314 = vshrl.u32 %v1225, 16
        %v1316 = vshll.u32 %v1225, 16
        %v1318 = vrot.slane %v1316, 1
        %v1319 = vor.u32 %v1314, %v1318
        %v1321 = vshll.u32 %v1226, 16
        %v1323 = vrot.slane %v1321, 1
        %v1324 = vsel %vm451, %v1319, %v1323
        %v1326 = vshrl.u32 %v1227, 16
        %v1328 = vshll.u32 %v1227, 16
        %v1330 = vrot.slane %v1328, 1
        %v1331 = vor.u32 %v1326, %v1330
        %v1333 = vshll.u32 %v1228, 16
        %v1335 = vrot.slane %v1333, 1
        %v1336 = vsel %vm451, %v1331, %v1335
        %v1338 = vshrl.u32 %v1229, 16
        %v1340 = vshll.u32 %v1229, 16
        %v1342 = vrot.slane %v1340, 1
        %v1343 = vor.u32 %v1338, %v1342
        %v1345 = vshll.u32 %v1230, 16
        %v1347 = vrot.slane %v1345, 1
        %v1348 = vsel %vm451, %v1343, %v1347
        %v1350 = vshrl.u32 %v1231, 16
        %v1352 = vshll.u32 %v1231, 16
        %v1354 = vrot.slane %v1352, 1
        %v1355 = vor.u32 %v1350, %v1354
        %v1357 = vshll.u32 %v1232, 16
        %v1359 = vrot.slane %v1357, 1
        %v1360 = vsel %vm451, %v1355, %v1359
        %v1362 = vshrl.u32 %v1233, 16
        %v1364 = vshll.u32 %v1233, 16
        %v1366 = vrot.slane %v1364, 1
        %v1367 = vor.u32 %v1362, %v1366
        %v1369 = vshll.u32 %v1234, 16
        %v1371 = vrot.slane %v1369, 1
        %v1372 = vsel %vm451, %v1367, %v1371
        %v1374 = vshrl.u32 %v1235, 16
        %v1376 = vshll.u32 %v1235, 16
        %v1378 = vrot.slane %v1376, 1
        %v1379 = vor.u32 %v1374, %v1378
        %v1381 = vshll.u32 %v1236, 16
        %v1383 = vrot.slane %v1381, 1
        %v1384 = vsel %vm451, %v1379, %v1383
        %v1386 = vshrl.u32 %v1237, 16
        %v1388 = vshll.u32 %v1237, 16
        %v1390 = vrot.slane %v1388, 1
        %v1391 = vor.u32 %v1386, %v1390
        %v1393 = vshll.u32 %v1238, 16
        %v1395 = vrot.slane %v1393, 1
        %v1396 = vsel %vm451, %v1391, %v1395
        %v1398 = vshrl.u32 %v1239, 16
        %v1400 = vshll.u32 %v1239, 16
        %v1402 = vrot.slane %v1400, 1
        %v1403 = vor.u32 %v1398, %v1402
        %v1405 = vshll.u32 %v1240, 16
        %v1407 = vrot.slane %v1405, 1
        %v1408 = vsel %vm451, %v1403, %v1407
        %1409 = vrot.lane.b32.xlu0 %v1252, 16
        %v1410 = vpop.permute.xlu0 %1409
        %1411 = vrot.lane.b32.xlu0 %v1264, 16
        %v1412 = vpop.permute.xlu0 %1411
        %1413 = vrot.lane.b32.xlu0 %v1276, 16
        %v1414 = vpop.permute.xlu0 %1413
        %1415 = vrot.lane.b32.xlu0 %v1288, 16
        %v1416 = vpop.permute.xlu0 %1415
        %1417 = vrot.lane.b32.xlu0 %v1300, 16
        %v1418 = vpop.permute.xlu0 %1417
        %1419 = vrot.lane.b32.xlu0 %v1312, 16
        %v1420 = vpop.permute.xlu0 %1419
        %1421 = vrot.lane.b32.xlu0 %v1324, 16
        %v1422 = vpop.permute.xlu0 %1421
        %1423 = vrot.lane.b32.xlu0 %v1336, 16
        %v1424 = vpop.permute.xlu0 %1423
        %1425 = vrot.lane.b32.xlu0 %v1348, 16
        %v1426 = vpop.permute.xlu0 %1425
        %1427 = vrot.lane.b32.xlu0 %v1360, 16
        %v1428 = vpop.permute.xlu0 %1427
        %1429 = vrot.lane.b32.xlu0 %v1372, 16
        %v1430 = vpop.permute.xlu0 %1429
        %1431 = vrot.lane.b32.xlu0 %v1384, 16
        %v1432 = vpop.permute.xlu0 %1431
        %1433 = vrot.lane.b32.xlu0 %v1396, 16
        %v1434 = vpop.permute.xlu0 %1433
        %1435 = vrot.lane.b32.xlu0 %v1408, 16
        %v1436 = vpop.permute.xlu0 %1435
        %vm1451 = vcmask 162944
        %1452 = vst.msk [vmem:[#allocation2] sm:$0xff] %vm1451, %v1410
        %1453 = vst.msk [vmem:[#allocation2 + $0x8] sm:$0xff] %vm1451, %v1412
        %1454 = vst.msk [vmem:[#allocation2 + $0x10] sm:$0xff] %vm1451, %v1414
        %1455 = vst.msk [vmem:[#allocation2 + $0x18] sm:$0xff] %vm1451, %v1416
        %1456 = vst.msk [vmem:[#allocation2 + $0x20] sm:$0xff] %vm1451, %v1418
        %1457 = vst.msk [vmem:[#allocation2 + $0x28] sm:$0xff] %vm1451, %v1420
        %1458 = vst.msk [vmem:[#allocation2 + $0x30] sm:$0xff] %vm1451, %v1422
        %1459 = vst.msk [vmem:[#allocation2 + $0x38] sm:$0xff] %vm1451, %v1424
        %1460 = vst.msk [vmem:[#allocation2 + $0x40] sm:$0xff] %vm1451, %v1426
        %1461 = vst.msk [vmem:[#allocation2 + $0x48] sm:$0xff] %vm1451, %v1428
        %1462 = vst.msk [vmem:[#allocation2 + $0x50] sm:$0xff] %vm1451, %v1430
        %1463 = vst.msk [vmem:[#allocation2 + $0x58] sm:$0xff] %vm1451, %v1432
        %1464 = vst.msk [vmem:[#allocation2 + $0x60] sm:$0xff] %vm1451, %v1434
        %1465 = vst.msk [vmem:[#allocation2 + $0x68] sm:$0xff] %vm1451, %v1436
        %v1466 = vld [vmem:[%s931] sm:$0xe]
        %v1467 = vld [vmem:[%s931 + $0x4] sm:$0xf]
        %v1468 = vld [vmem:[%s931 + $0x8] sm:$0x1]
        %v1469 = vld [vmem:[%s931 + $0xc] sm:$0xe]
        %v1470 = vld [vmem:[%s931 + $0x10] sm:$0xf]
        %v1471 = vld [vmem:[%s931 + $0x14] sm:$0x1]
        %v1472 = vld [vmem:[%s931 + $0x18] sm:$0xe]
        %v1473 = vld [vmem:[%s931 + $0x1c] sm:$0xf]
        %v1474 = vld [vmem:[%s931 + $0x20] sm:$0x1]
        %v1475 = vld [vmem:[%s931 + $0x24] sm:$0xe]
        %v1476 = vld [vmem:[%s931 + $0x28] sm:$0xf]
        %v1477 = vld [vmem:[%s931 + $0x2c] sm:$0x1]
        %v1478 = vld [vmem:[%s931 + $0x30] sm:$0xe]
        %v1479 = vld [vmem:[%s931 + $0x34] sm:$0xf]
        %v1480 = vld [vmem:[%s931 + $0x38] sm:$0x1]
        %v1481 = vld [vmem:[%s931 + $0x3c] sm:$0xe]
        %v1482 = vld [vmem:[%s931 + $0x40] sm:$0xf]
        %v1483 = vld [vmem:[%s931 + $0x44] sm:$0x1]
        %v1484 = vld [vmem:[%s931 + $0x48] sm:$0xe]
        %v1485 = vld [vmem:[%s931 + $0x4c] sm:$0xf]
        %v1486 = vld [vmem:[%s931 + $0x50] sm:$0x1]
        %v1487 = vld [vmem:[%s931 + $0x54] sm:$0xe]
        %v1488 = vld [vmem:[%s931 + $0x58] sm:$0xf]
        %v1489 = vld [vmem:[%s931 + $0x5c] sm:$0x1]
        %v1490 = vld [vmem:[%s931 + $0x60] sm:$0xe]
        %v1491 = vld [vmem:[%s931 + $0x64] sm:$0xf]
        %v1492 = vld [vmem:[%s931 + $0x68] sm:$0x1]
        %v1493 = vld [vmem:[%s931 + $0x6c] sm:$0xe]
        %v1494 = vld [vmem:[%s931 + $0x70] sm:$0xf]
        %v1495 = vld [vmem:[%s931 + $0x74] sm:$0x1]
        %v1496 = vld [vmem:[%s931 + $0x78] sm:$0xe]
        %v1497 = vld [vmem:[%s931 + $0x7c] sm:$0xf]
        %v1498 = vld [vmem:[%s931 + $0x80] sm:$0x1]
        %v1499 = vld [vmem:[%s931 + $0x84] sm:$0xe]
        %v1500 = vld [vmem:[%s931 + $0x88] sm:$0xf]
        %v1501 = vld [vmem:[%s931 + $0x8c] sm:$0x1]
        %v1502 = vld [vmem:[%s931 + $0x90] sm:$0xe]
        %v1503 = vld [vmem:[%s931 + $0x94] sm:$0xf]
        %v1504 = vld [vmem:[%s931 + $0x98] sm:$0x1]
        %v1505 = vld [vmem:[%s931 + $0x9c] sm:$0xe]
        %v1506 = vld [vmem:[%s931 + $0xa0] sm:$0xf]
        %v1507 = vld [vmem:[%s931 + $0xa4] sm:$0x1]
        %v1550 = vunpack.c.l.b16 %v1466
        %v1551 = vunpack.c.l.b16 %v1467
        %v1552 = vunpack.c.l.b16 %v1468
        %v1553 = vunpack.c.l.b16 %v1469
        %v1554 = vunpack.c.l.b16 %v1470
        %v1555 = vunpack.c.l.b16 %v1471
        %v1556 = vunpack.c.l.b16 %v1472
        %v1557 = vunpack.c.l.b16 %v1473
        %v1558 = vunpack.c.l.b16 %v1474
        %v1559 = vunpack.c.l.b16 %v1475
        %v1560 = vunpack.c.l.b16 %v1476
        %v1561 = vunpack.c.l.b16 %v1477
        %v1562 = vunpack.c.l.b16 %v1478
        %v1563 = vunpack.c.l.b16 %v1479
        %v1564 = vunpack.c.l.b16 %v1480
        %v1565 = vunpack.c.l.b16 %v1481
        %v1566 = vunpack.c.l.b16 %v1482
        %v1567 = vunpack.c.l.b16 %v1483
        %v1568 = vunpack.c.l.b16 %v1484
        %v1569 = vunpack.c.l.b16 %v1485
        %v1570 = vunpack.c.l.b16 %v1486
        %v1571 = vunpack.c.l.b16 %v1487
        %v1572 = vunpack.c.l.b16 %v1488
        %v1573 = vunpack.c.l.b16 %v1489
        %v1574 = vunpack.c.l.b16 %v1490
        %v1575 = vunpack.c.l.b16 %v1491
        %v1576 = vunpack.c.l.b16 %v1492
        %v1577 = vunpack.c.l.b16 %v1493
        %v1578 = vunpack.c.l.b16 %v1494
        %v1579 = vunpack.c.l.b16 %v1495
        %v1580 = vunpack.c.l.b16 %v1496
        %v1581 = vunpack.c.l.b16 %v1497
        %v1582 = vunpack.c.l.b16 %v1498
        %v1583 = vunpack.c.l.b16 %v1499
        %v1584 = vunpack.c.l.b16 %v1500
        %v1585 = vunpack.c.l.b16 %v1501
        %v1586 = vunpack.c.l.b16 %v1502
        %v1587 = vunpack.c.l.b16 %v1503
        %v1588 = vunpack.c.l.b16 %v1504
        %v1589 = vunpack.c.l.b16 %v1505
        %v1590 = vunpack.c.l.b16 %v1506
        %v1591 = vunpack.c.l.b16 %v1507
        %v1592 = vpack.c.b16 %v1551, %v1550
        %v1593 = vpack.c.b16 %v1552, %v1552
        %v1594 = vpack.c.b16 %v1554, %v1553
        %v1595 = vpack.c.b16 %v1555, %v1555
        %v1596 = vpack.c.b16 %v1557, %v1556
        %v1597 = vpack.c.b16 %v1558, %v1558
        %v1598 = vpack.c.b16 %v1560, %v1559
        %v1599 = vpack.c.b16 %v1561, %v1561
        %v1600 = vpack.c.b16 %v1563, %v1562
        %v1601 = vpack.c.b16 %v1564, %v1564
        %v1602 = vpack.c.b16 %v1566, %v1565
        %v1603 = vpack.c.b16 %v1567, %v1567
        %v1604 = vpack.c.b16 %v1569, %v1568
        %v1605 = vpack.c.b16 %v1570, %v1570
        %v1606 = vpack.c.b16 %v1572, %v1571
        %v1607 = vpack.c.b16 %v1573, %v1573
        %v1608 = vpack.c.b16 %v1575, %v1574
        %v1609 = vpack.c.b16 %v1576, %v1576
        %v1610 = vpack.c.b16 %v1578, %v1577
        %v1611 = vpack.c.b16 %v1579, %v1579
        %v1612 = vpack.c.b16 %v1581, %v1580
        %v1613 = vpack.c.b16 %v1582, %v1582
        %v1614 = vpack.c.b16 %v1584, %v1583
        %v1615 = vpack.c.b16 %v1585, %v1585
        %v1616 = vpack.c.b16 %v1587, %v1586
        %v1617 = vpack.c.b16 %v1588, %v1588
        %v1618 = vpack.c.b16 %v1590, %v1589
        %v1619 = vpack.c.b16 %v1591, %v1591
        %v1620 = vrot.slane %v1592, 1
        %v1621 = vrot.slane %v1593, 1
        %v1622 = vsel %vm831, %v1620, %v1621
        %v1623 = vrot.slane %v1594, 1
        %v1624 = vrot.slane %v1595, 1
        %v1625 = vsel %vm831, %v1623, %v1624
        %v1626 = vrot.slane %v1596, 1
        %v1627 = vrot.slane %v1597, 1
        %v1628 = vsel %vm831, %v1626, %v1627
        %v1629 = vrot.slane %v1598, 1
        %v1630 = vrot.slane %v1599, 1
        %v1631 = vsel %vm831, %v1629, %v1630
        %v1632 = vrot.slane %v1600, 1
        %v1633 = vrot.slane %v1601, 1
        %v1634 = vsel %vm831, %v1632, %v1633
        %v1635 = vrot.slane %v1602, 1
        %v1636 = vrot.slane %v1603, 1
        %v1637 = vsel %vm831, %v1635, %v1636
        %v1638 = vrot.slane %v1604, 1
        %v1639 = vrot.slane %v1605, 1
        %v1640 = vsel %vm831, %v1638, %v1639
        %v1641 = vrot.slane %v1606, 1
        %v1642 = vrot.slane %v1607, 1
        %v1643 = vsel %vm831, %v1641, %v1642
        %v1644 = vrot.slane %v1608, 1
        %v1645 = vrot.slane %v1609, 1
        %v1646 = vsel %vm831, %v1644, %v1645
        %v1647 = vrot.slane %v1610, 1
        %v1648 = vrot.slane %v1611, 1
        %v1649 = vsel %vm831, %v1647, %v1648
        %v1650 = vrot.slane %v1612, 1
        %v1651 = vrot.slane %v1613, 1
        %v1652 = vsel %vm831, %v1650, %v1651
        %v1653 = vrot.slane %v1614, 1
        %v1654 = vrot.slane %v1615, 1
        %v1655 = vsel %vm831, %v1653, %v1654
        %v1656 = vrot.slane %v1616, 1
        %v1657 = vrot.slane %v1617, 1
        %v1658 = vsel %vm831, %v1656, %v1657
        %v1659 = vrot.slane %v1618, 1
        %v1660 = vrot.slane %v1619, 1
        %v1661 = vsel %vm831, %v1659, %v1660
        %1662 = vrot.lane.b32.xlu0 %v1622, 20
        %v1663 = vpop.permute.xlu0 %1662
        %1664 = vrot.lane.b32.xlu0 %v1625, 20
        %v1665 = vpop.permute.xlu0 %1664
        %1666 = vrot.lane.b32.xlu0 %v1628, 20
        %v1667 = vpop.permute.xlu0 %1666
        %1668 = vrot.lane.b32.xlu0 %v1631, 20
        %v1669 = vpop.permute.xlu0 %1668
        %1670 = vrot.lane.b32.xlu0 %v1634, 20
        %v1671 = vpop.permute.xlu0 %1670
        %1672 = vrot.lane.b32.xlu0 %v1637, 20
        %v1673 = vpop.permute.xlu0 %1672
        %1674 = vrot.lane.b32.xlu0 %v1640, 20
        %v1675 = vpop.permute.xlu0 %1674
        %1676 = vrot.lane.b32.xlu0 %v1643, 20
        %v1677 = vpop.permute.xlu0 %1676
        %1678 = vrot.lane.b32.xlu0 %v1646, 20
        %v1679 = vpop.permute.xlu0 %1678
        %1680 = vrot.lane.b32.xlu0 %v1649, 20
        %v1681 = vpop.permute.xlu0 %1680
        %1682 = vrot.lane.b32.xlu0 %v1652, 20
        %v1683 = vpop.permute.xlu0 %1682
        %1684 = vrot.lane.b32.xlu0 %v1655, 20
        %v1685 = vpop.permute.xlu0 %1684
        %1686 = vrot.lane.b32.xlu0 %v1658, 20
        %v1687 = vpop.permute.xlu0 %1686
        %1688 = vrot.lane.b32.xlu0 %v1661, 20
        %v1689 = vpop.permute.xlu0 %1688
        %vm1704 = vcmask 195744
        %1705 = vst.msk [vmem:[#allocation2] sm:$0xff] %vm1704, %v1663
        %1706 = vst.msk [vmem:[#allocation2 + $0x8] sm:$0xff] %vm1704, %v1665
        %1707 = vst.msk [vmem:[#allocation2 + $0x10] sm:$0xff] %vm1704, %v1667
        %1708 = vst.msk [vmem:[#allocation2 + $0x18] sm:$0xff] %vm1704, %v1669
        %1709 = vst.msk [vmem:[#allocation2 + $0x20] sm:$0xff] %vm1704, %v1671
        %1710 = vst.msk [vmem:[#allocation2 + $0x28] sm:$0xff] %vm1704, %v1673
        %1711 = vst.msk [vmem:[#allocation2 + $0x30] sm:$0xff] %vm1704, %v1675
        %1712 = vst.msk [vmem:[#allocation2 + $0x38] sm:$0xff] %vm1704, %v1677
        %1713 = vst.msk [vmem:[#allocation2 + $0x40] sm:$0xff] %vm1704, %v1679
        %1714 = vst.msk [vmem:[#allocation2 + $0x48] sm:$0xff] %vm1704, %v1681
        %1715 = vst.msk [vmem:[#allocation2 + $0x50] sm:$0xff] %vm1704, %v1683
        %1716 = vst.msk [vmem:[#allocation2 + $0x58] sm:$0xff] %vm1704, %v1685
        %1717 = vst.msk [vmem:[#allocation2 + $0x60] sm:$0xff] %vm1704, %v1687
        %1718 = vst.msk [vmem:[#allocation2 + $0x68] sm:$0xff] %vm1704, %v1689
        %s1719 = scalar_lea.vmem %s168, 24
        %v1720 = vld [vmem:[%s1719] sm:$0xf]
        %v1721 = vld [vmem:[%s1719 + $0x4] sm:$0xf]
        %v1722 = vld [vmem:[%s1719 + $0xc] sm:$0xf]
        %v1723 = vld [vmem:[%s1719 + $0x10] sm:$0xf]
        %v1724 = vld [vmem:[%s1719 + $0x18] sm:$0xf]
        %v1725 = vld [vmem:[%s1719 + $0x1c] sm:$0xf]
        %v1726 = vld [vmem:[%s1719 + $0x24] sm:$0xf]
        %v1727 = vld [vmem:[%s1719 + $0x28] sm:$0xf]
        %v1728 = vld [vmem:[%s1719 + $0x30] sm:$0xf]
        %v1729 = vld [vmem:[%s1719 + $0x34] sm:$0xf]
        %v1730 = vld [vmem:[%s1719 + $0x3c] sm:$0xf]
        %v1731 = vld [vmem:[%s1719 + $0x40] sm:$0xf]
        %v1732 = vld [vmem:[%s1719 + $0x48] sm:$0xf]
        %v1733 = vld [vmem:[%s1719 + $0x4c] sm:$0xf]
        %v1734 = vld [vmem:[%s1719 + $0x54] sm:$0xf]
        %v1735 = vld [vmem:[%s1719 + $0x58] sm:$0xf]
        %v1736 = vld [vmem:[%s1719 + $0x60] sm:$0xf]
        %v1737 = vld [vmem:[%s1719 + $0x64] sm:$0xf]
        %v1738 = vld [vmem:[%s1719 + $0x6c] sm:$0xf]
        %v1739 = vld [vmem:[%s1719 + $0x70] sm:$0xf]
        %v1740 = vld [vmem:[%s1719 + $0x78] sm:$0xf]
        %v1741 = vld [vmem:[%s1719 + $0x7c] sm:$0xf]
        %v1742 = vld [vmem:[%s1719 + $0x84] sm:$0xf]
        %v1743 = vld [vmem:[%s1719 + $0x88] sm:$0xf]
        %v1744 = vld [vmem:[%s1719 + $0x90] sm:$0xf]
        %v1745 = vld [vmem:[%s1719 + $0x94] sm:$0xf]
        %v1746 = vld [vmem:[%s1719 + $0x9c] sm:$0xf]
        %v1747 = vld [vmem:[%s1719 + $0xa0] sm:$0xf]
        %v1776 = vunpack.c.l.b16 %v1720
        %v1777 = vunpack.c.l.b16 %v1721
        %v1778 = vunpack.c.l.b16 %v1722
        %v1779 = vunpack.c.l.b16 %v1723
        %v1780 = vunpack.c.l.b16 %v1724
        %v1781 = vunpack.c.l.b16 %v1725
        %v1782 = vunpack.c.l.b16 %v1726
        %v1783 = vunpack.c.l.b16 %v1727
        %v1784 = vunpack.c.l.b16 %v1728
        %v1785 = vunpack.c.l.b16 %v1729
        %v1786 = vunpack.c.l.b16 %v1730
        %v1787 = vunpack.c.l.b16 %v1731
        %v1788 = vunpack.c.l.b16 %v1732
        %v1789 = vunpack.c.l.b16 %v1733
        %v1790 = vunpack.c.l.b16 %v1734
        %v1791 = vunpack.c.l.b16 %v1735
        %v1792 = vunpack.c.l.b16 %v1736
        %v1793 = vunpack.c.l.b16 %v1737
        %v1794 = vunpack.c.l.b16 %v1738
        %v1795 = vunpack.c.l.b16 %v1739
        %v1796 = vunpack.c.l.b16 %v1740
        %v1797 = vunpack.c.l.b16 %v1741
        %v1798 = vunpack.c.l.b16 %v1742
        %v1799 = vunpack.c.l.b16 %v1743
        %v1800 = vunpack.c.l.b16 %v1744
        %v1801 = vunpack.c.l.b16 %v1745
        %v1802 = vunpack.c.l.b16 %v1746
        %v1803 = vunpack.c.l.b16 %v1747
        %v1804 = vpack.c.b16 %v1777, %v1776
        %v1805 = vpack.c.b16 %v1779, %v1778
        %v1806 = vpack.c.b16 %v1781, %v1780
        %v1807 = vpack.c.b16 %v1783, %v1782
        %v1808 = vpack.c.b16 %v1785, %v1784
        %v1809 = vpack.c.b16 %v1787, %v1786
        %v1810 = vpack.c.b16 %v1789, %v1788
        %v1811 = vpack.c.b16 %v1791, %v1790
        %v1812 = vpack.c.b16 %v1793, %v1792
        %v1813 = vpack.c.b16 %v1795, %v1794
        %v1814 = vpack.c.b16 %v1797, %v1796
        %v1815 = vpack.c.b16 %v1799, %v1798
        %v1816 = vpack.c.b16 %v1801, %v1800
        %v1817 = vpack.c.b16 %v1803, %v1802
        %1818 = vrot.lane.b32.xlu0 %v1804, 24
        %v1819 = vpop.permute.xlu0 %1818
        %1820 = vrot.lane.b32.xlu0 %v1805, 24
        %v1821 = vpop.permute.xlu0 %1820
        %1822 = vrot.lane.b32.xlu0 %v1806, 24
        %v1823 = vpop.permute.xlu0 %1822
        %1824 = vrot.lane.b32.xlu0 %v1807, 24
        %v1825 = vpop.permute.xlu0 %1824
        %1826 = vrot.lane.b32.xlu0 %v1808, 24
        %v1827 = vpop.permute.xlu0 %1826
        %1828 = vrot.lane.b32.xlu0 %v1809, 24
        %v1829 = vpop.permute.xlu0 %1828
        %1830 = vrot.lane.b32.xlu0 %v1810, 24
        %v1831 = vpop.permute.xlu0 %1830
        %1832 = vrot.lane.b32.xlu0 %v1811, 24
        %v1833 = vpop.permute.xlu0 %1832
        %1834 = vrot.lane.b32.xlu0 %v1812, 24
        %v1835 = vpop.permute.xlu0 %1834
        %1836 = vrot.lane.b32.xlu0 %v1813, 24
        %v1837 = vpop.permute.xlu0 %1836
        %1838 = vrot.lane.b32.xlu0 %v1814, 24
        %v1839 = vpop.permute.xlu0 %1838
        %1840 = vrot.lane.b32.xlu0 %v1815, 24
        %v1841 = vpop.permute.xlu0 %1840
        %1842 = vrot.lane.b32.xlu0 %v1816, 24
        %v1843 = vpop.permute.xlu0 %1842
        %1844 = vrot.lane.b32.xlu0 %v1817, 24
        %v1845 = vpop.permute.xlu0 %1844
        %vm1860 = vcmask 228544
        %1861 = vst.msk [vmem:[#allocation2] sm:$0xff] %vm1860, %v1819
        %1862 = vst.msk [vmem:[#allocation2 + $0x8] sm:$0xff] %vm1860, %v1821
        %1863 = vst.msk [vmem:[#allocation2 + $0x10] sm:$0xff] %vm1860, %v1823
        %1864 = vst.msk [vmem:[#allocation2 + $0x18] sm:$0xff] %vm1860, %v1825
        %1865 = vst.msk [vmem:[#allocation2 + $0x20] sm:$0xff] %vm1860, %v1827
        %1866 = vst.msk [vmem:[#allocation2 + $0x28] sm:$0xff] %vm1860, %v1829
        %1867 = vst.msk [vmem:[#allocation2 + $0x30] sm:$0xff] %vm1860, %v1831
        %1868 = vst.msk [vmem:[#allocation2 + $0x38] sm:$0xff] %vm1860, %v1833
        %1869 = vst.msk [vmem:[#allocation2 + $0x40] sm:$0xff] %vm1860, %v1835
        %1870 = vst.msk [vmem:[#allocation2 + $0x48] sm:$0xff] %vm1860, %v1837
        %1871 = vst.msk [vmem:[#allocation2 + $0x50] sm:$0xff] %vm1860, %v1839
        %1872 = vst.msk [vmem:[#allocation2 + $0x58] sm:$0xff] %vm1860, %v1841
        %1873 = vst.msk [vmem:[#allocation2 + $0x60] sm:$0xff] %vm1860, %v1843
        %1874 = vst.msk [vmem:[#allocation2 + $0x68] sm:$0xff] %vm1860, %v1845
        %v1875 = vld [vmem:[%s1719] sm:$0xf]
        %v1876 = vld [vmem:[%s1719 + $0x4] sm:$0xf]
        %v1877 = vld [vmem:[%s1719 + $0x8] sm:$0x1]
        %v1878 = vld [vmem:[%s1719 + $0xc] sm:$0xf]
        %v1879 = vld [vmem:[%s1719 + $0x10] sm:$0xf]
        %v1880 = vld [vmem:[%s1719 + $0x14] sm:$0x1]
        %v1881 = vld [vmem:[%s1719 + $0x18] sm:$0xf]
        %v1882 = vld [vmem:[%s1719 + $0x1c] sm:$0xf]
        %v1883 = vld [vmem:[%s1719 + $0x20] sm:$0x1]
        %v1884 = vld [vmem:[%s1719 + $0x24] sm:$0xf]
        %v1885 = vld [vmem:[%s1719 + $0x28] sm:$0xf]
        %v1886 = vld [vmem:[%s1719 + $0x2c] sm:$0x1]
        %v1887 = vld [vmem:[%s1719 + $0x30] sm:$0xf]
        %v1888 = vld [vmem:[%s1719 + $0x34] sm:$0xf]
        %v1889 = vld [vmem:[%s1719 + $0x38] sm:$0x1]
        %v1890 = vld [vmem:[%s1719 + $0x3c] sm:$0xf]
        %v1891 = vld [vmem:[%s1719 + $0x40] sm:$0xf]
        %v1892 = vld [vmem:[%s1719 + $0x44] sm:$0x1]
        %v1893 = vld [vmem:[%s1719 + $0x48] sm:$0xf]
        %v1894 = vld [vmem:[%s1719 + $0x4c] sm:$0xf]
        %v1895 = vld [vmem:[%s1719 + $0x50] sm:$0x1]
        %v1896 = vld [vmem:[%s1719 + $0x54] sm:$0xf]
        %v1897 = vld [vmem:[%s1719 + $0x58] sm:$0xf]
        %v1898 = vld [vmem:[%s1719 + $0x5c] sm:$0x1]
        %v1899 = vld [vmem:[%s1719 + $0x60] sm:$0xf]
        %v1900 = vld [vmem:[%s1719 + $0x64] sm:$0xf]
        %v1901 = vld [vmem:[%s1719 + $0x68] sm:$0x1]
        %v1902 = vld [vmem:[%s1719 + $0x6c] sm:$0xf]
        %v1903 = vld [vmem:[%s1719 + $0x70] sm:$0xf]
        %v1904 = vld [vmem:[%s1719 + $0x74] sm:$0x1]
        %v1905 = vld [vmem:[%s1719 + $0x78] sm:$0xf]
        %v1906 = vld [vmem:[%s1719 + $0x7c] sm:$0xf]
        %v1907 = vld [vmem:[%s1719 + $0x80] sm:$0x1]
        %v1908 = vld [vmem:[%s1719 + $0x84] sm:$0xf]
        %v1909 = vld [vmem:[%s1719 + $0x88] sm:$0xf]
        %v1910 = vld [vmem:[%s1719 + $0x8c] sm:$0x1]
        %v1911 = vld [vmem:[%s1719 + $0x90] sm:$0xf]
        %v1912 = vld [vmem:[%s1719 + $0x94] sm:$0xf]
        %v1913 = vld [vmem:[%s1719 + $0x98] sm:$0x1]
        %v1914 = vld [vmem:[%s1719 + $0x9c] sm:$0xf]
        %v1915 = vld [vmem:[%s1719 + $0xa0] sm:$0xf]
        %v1916 = vld [vmem:[%s1719 + $0xa4] sm:$0x1]
        %v1959 = vunpack.c.l.b16 %v1875
        %v1960 = vunpack.c.l.b16 %v1876
        %v1961 = vunpack.c.l.b16 %v1877
        %v1962 = vunpack.c.l.b16 %v1878
        %v1963 = vunpack.c.l.b16 %v1879
        %v1964 = vunpack.c.l.b16 %v1880
        %v1965 = vunpack.c.l.b16 %v1881
        %v1966 = vunpack.c.l.b16 %v1882
        %v1967 = vunpack.c.l.b16 %v1883
        %v1968 = vunpack.c.l.b16 %v1884
        %v1969 = vunpack.c.l.b16 %v1885
        %v1970 = vunpack.c.l.b16 %v1886
        %v1971 = vunpack.c.l.b16 %v1887
        %v1972 = vunpack.c.l.b16 %v1888
        %v1973 = vunpack.c.l.b16 %v1889
        %v1974 = vunpack.c.l.b16 %v1890
        %v1975 = vunpack.c.l.b16 %v1891
        %v1976 = vunpack.c.l.b16 %v1892
        %v1977 = vunpack.c.l.b16 %v1893
        %v1978 = vunpack.c.l.b16 %v1894
        %v1979 = vunpack.c.l.b16 %v1895
        %v1980 = vunpack.c.l.b16 %v1896
        %v1981 = vunpack.c.l.b16 %v1897
        %v1982 = vunpack.c.l.b16 %v1898
        %v1983 = vunpack.c.l.b16 %v1899
        %v1984 = vunpack.c.l.b16 %v1900
        %v1985 = vunpack.c.l.b16 %v1901
        %v1986 = vunpack.c.l.b16 %v1902
        %v1987 = vunpack.c.l.b16 %v1903
        %v1988 = vunpack.c.l.b16 %v1904
        %v1989 = vunpack.c.l.b16 %v1905
        %v1990 = vunpack.c.l.b16 %v1906
        %v1991 = vunpack.c.l.b16 %v1907
        %v1992 = vunpack.c.l.b16 %v1908
        %v1993 = vunpack.c.l.b16 %v1909
        %v1994 = vunpack.c.l.b16 %v1910
        %v1995 = vunpack.c.l.b16 %v1911
        %v1996 = vunpack.c.l.b16 %v1912
        %v1997 = vunpack.c.l.b16 %v1913
        %v1998 = vunpack.c.l.b16 %v1914
        %v1999 = vunpack.c.l.b16 %v1915
        %v2000 = vunpack.c.l.b16 %v1916
        %v2001 = vpack.c.b16 %v1960, %v1959
        %v2002 = vpack.c.b16 %v1961, %v1961
        %v2003 = vpack.c.b16 %v1963, %v1962
        %v2004 = vpack.c.b16 %v1964, %v1964
        %v2005 = vpack.c.b16 %v1966, %v1965
        %v2006 = vpack.c.b16 %v1967, %v1967
        %v2007 = vpack.c.b16 %v1969, %v1968
        %v2008 = vpack.c.b16 %v1970, %v1970
        %v2009 = vpack.c.b16 %v1972, %v1971
        %v2010 = vpack.c.b16 %v1973, %v1973
        %v2011 = vpack.c.b16 %v1975, %v1974
        %v2012 = vpack.c.b16 %v1976, %v1976
        %v2013 = vpack.c.b16 %v1978, %v1977
        %v2014 = vpack.c.b16 %v1979, %v1979
        %v2015 = vpack.c.b16 %v1981, %v1980
        %v2016 = vpack.c.b16 %v1982, %v1982
        %v2017 = vpack.c.b16 %v1984, %v1983
        %v2018 = vpack.c.b16 %v1985, %v1985
        %v2019 = vpack.c.b16 %v1987, %v1986
        %v2020 = vpack.c.b16 %v1988, %v1988
        %v2021 = vpack.c.b16 %v1990, %v1989
        %v2022 = vpack.c.b16 %v1991, %v1991
        %v2023 = vpack.c.b16 %v1993, %v1992
        %v2024 = vpack.c.b16 %v1994, %v1994
        %v2025 = vpack.c.b16 %v1996, %v1995
        %v2026 = vpack.c.b16 %v1997, %v1997
        %v2027 = vpack.c.b16 %v1999, %v1998
        %v2028 = vpack.c.b16 %v2000, %v2000
        %v2030 = vshrl.u32 %v2001, 16
        %v2032 = vshll.u32 %v2001, 16
        %v2034 = vrot.slane %v2032, 1
        %v2035 = vor.u32 %v2030, %v2034
        %v2037 = vshll.u32 %v2002, 16
        %v2039 = vrot.slane %v2037, 1
        %v2040 = vsel %vm451, %v2035, %v2039
        %v2042 = vshrl.u32 %v2003, 16
        %v2044 = vshll.u32 %v2003, 16
        %v2046 = vrot.slane %v2044, 1
        %v2047 = vor.u32 %v2042, %v2046
        %v2049 = vshll.u32 %v2004, 16
        %v2051 = vrot.slane %v2049, 1
        %v2052 = vsel %vm451, %v2047, %v2051
        %v2054 = vshrl.u32 %v2005, 16
        %v2056 = vshll.u32 %v2005, 16
        %v2058 = vrot.slane %v2056, 1
        %v2059 = vor.u32 %v2054, %v2058
        %v2061 = vshll.u32 %v2006, 16
        %v2063 = vrot.slane %v2061, 1
        %v2064 = vsel %vm451, %v2059, %v2063
        %v2066 = vshrl.u32 %v2007, 16
        %v2068 = vshll.u32 %v2007, 16
        %v2070 = vrot.slane %v2068, 1
        %v2071 = vor.u32 %v2066, %v2070
        %v2073 = vshll.u32 %v2008, 16
        %v2075 = vrot.slane %v2073, 1
        %v2076 = vsel %vm451, %v2071, %v2075
        %v2078 = vshrl.u32 %v2009, 16
        %v2080 = vshll.u32 %v2009, 16
        %v2082 = vrot.slane %v2080, 1
        %v2083 = vor.u32 %v2078, %v2082
        %v2085 = vshll.u32 %v2010, 16
        %v2087 = vrot.slane %v2085, 1
        %v2088 = vsel %vm451, %v2083, %v2087
        %v2090 = vshrl.u32 %v2011, 16
        %v2092 = vshll.u32 %v2011, 16
        %v2094 = vrot.slane %v2092, 1
        %v2095 = vor.u32 %v2090, %v2094
        %v2097 = vshll.u32 %v2012, 16
        %v2099 = vrot.slane %v2097, 1
        %v2100 = vsel %vm451, %v2095, %v2099
        %v2102 = vshrl.u32 %v2013, 16
        %v2104 = vshll.u32 %v2013, 16
        %v2106 = vrot.slane %v2104, 1
        %v2107 = vor.u32 %v2102, %v2106
        %v2109 = vshll.u32 %v2014, 16
        %v2111 = vrot.slane %v2109, 1
        %v2112 = vsel %vm451, %v2107, %v2111
        %v2114 = vshrl.u32 %v2015, 16
        %v2116 = vshll.u32 %v2015, 16
        %v2118 = vrot.slane %v2116, 1
        %v2119 = vor.u32 %v2114, %v2118
        %v2121 = vshll.u32 %v2016, 16
        %v2123 = vrot.slane %v2121, 1
        %v2124 = vsel %vm451, %v2119, %v2123
        %v2126 = vshrl.u32 %v2017, 16
        %v2128 = vshll.u32 %v2017, 16
        %v2130 = vrot.slane %v2128, 1
        %v2131 = vor.u32 %v2126, %v2130
        %v2133 = vshll.u32 %v2018, 16
        %v2135 = vrot.slane %v2133, 1
        %v2136 = vsel %vm451, %v2131, %v2135
        %v2138 = vshrl.u32 %v2019, 16
        %v2140 = vshll.u32 %v2019, 16
        %v2142 = vrot.slane %v2140, 1
        %v2143 = vor.u32 %v2138, %v2142
        %v2145 = vshll.u32 %v2020, 16
        %v2147 = vrot.slane %v2145, 1
        %v2148 = vsel %vm451, %v2143, %v2147
        %v2150 = vshrl.u32 %v2021, 16
        %v2152 = vshll.u32 %v2021, 16
        %v2154 = vrot.slane %v2152, 1
        %v2155 = vor.u32 %v2150, %v2154
        %v2157 = vshll.u32 %v2022, 16
        %v2159 = vrot.slane %v2157, 1
        %v2160 = vsel %vm451, %v2155, %v2159
        %v2162 = vshrl.u32 %v2023, 16
        %v2164 = vshll.u32 %v2023, 16
        %v2166 = vrot.slane %v2164, 1
        %v2167 = vor.u32 %v2162, %v2166
        %v2169 = vshll.u32 %v2024, 16
        %v2171 = vrot.slane %v2169, 1
        %v2172 = vsel %vm451, %v2167, %v2171
        %v2174 = vshrl.u32 %v2025, 16
        %v2176 = vshll.u32 %v2025, 16
        %v2178 = vrot.slane %v2176, 1
        %v2179 = vor.u32 %v2174, %v2178
        %v2181 = vshll.u32 %v2026, 16
        %v2183 = vrot.slane %v2181, 1
        %v2184 = vsel %vm451, %v2179, %v2183
        %v2186 = vshrl.u32 %v2027, 16
        %v2188 = vshll.u32 %v2027, 16
        %v2190 = vrot.slane %v2188, 1
        %v2191 = vor.u32 %v2186, %v2190
        %v2193 = vshll.u32 %v2028, 16
        %v2195 = vrot.slane %v2193, 1
        %v2196 = vsel %vm451, %v2191, %v2195
        %2197 = vrot.lane.b32.xlu0 %v2040, 28
        %v2198 = vpop.permute.xlu0 %2197
        %2199 = vrot.lane.b32.xlu0 %v2052, 28
        %v2200 = vpop.permute.xlu0 %2199
        %2201 = vrot.lane.b32.xlu0 %v2064, 28
        %v2202 = vpop.permute.xlu0 %2201
        %2203 = vrot.lane.b32.xlu0 %v2076, 28
        %v2204 = vpop.permute.xlu0 %2203
        %2205 = vrot.lane.b32.xlu0 %v2088, 28
        %v2206 = vpop.permute.xlu0 %2205
        %2207 = vrot.lane.b32.xlu0 %v2100, 28
        %v2208 = vpop.permute.xlu0 %2207
        %2209 = vrot.lane.b32.xlu0 %v2112, 28
        %v2210 = vpop.permute.xlu0 %2209
        %2211 = vrot.lane.b32.xlu0 %v2124, 28
        %v2212 = vpop.permute.xlu0 %2211
        %2213 = vrot.lane.b32.xlu0 %v2136, 28
        %v2214 = vpop.permute.xlu0 %2213
        %2215 = vrot.lane.b32.xlu0 %v2148, 28
        %v2216 = vpop.permute.xlu0 %2215
        %2217 = vrot.lane.b32.xlu0 %v2160, 28
        %v2218 = vpop.permute.xlu0 %2217
        %2219 = vrot.lane.b32.xlu0 %v2172, 28
        %v2220 = vpop.permute.xlu0 %2219
        %2221 = vrot.lane.b32.xlu0 %v2184, 28
        %v2222 = vpop.permute.xlu0 %2221
        %2223 = vrot.lane.b32.xlu0 %v2196, 28
        %v2224 = vpop.permute.xlu0 %2223
        %vm2239 = vcmask 261344
        %2240 = vst.msk [vmem:[#allocation2] sm:$0xff] %vm2239, %v2198
        %2241 = vst.msk [vmem:[#allocation2 + $0x8] sm:$0xff] %vm2239, %v2200
        %2242 = vst.msk [vmem:[#allocation2 + $0x10] sm:$0xff] %vm2239, %v2202
        %2243 = vst.msk [vmem:[#allocation2 + $0x18] sm:$0xff] %vm2239, %v2204
        %2244 = vst.msk [vmem:[#allocation2 + $0x20] sm:$0xff] %vm2239, %v2206
        %2245 = vst.msk [vmem:[#allocation2 + $0x28] sm:$0xff] %vm2239, %v2208
        %2246 = vst.msk [vmem:[#allocation2 + $0x30] sm:$0xff] %vm2239, %v2210
        %2247 = vst.msk [vmem:[#allocation2 + $0x38] sm:$0xff] %vm2239, %v2212
        %2248 = vst.msk [vmem:[#allocation2 + $0x40] sm:$0xff] %vm2239, %v2214
        %2249 = vst.msk [vmem:[#allocation2 + $0x48] sm:$0xff] %vm2239, %v2216
        %2250 = vst.msk [vmem:[#allocation2 + $0x50] sm:$0xff] %vm2239, %v2218
        %2251 = vst.msk [vmem:[#allocation2 + $0x58] sm:$0xff] %vm2239, %v2220
        %2252 = vst.msk [vmem:[#allocation2 + $0x60] sm:$0xff] %vm2239, %v2222
        %2253 = vst.msk [vmem:[#allocation2 + $0x68] sm:$0xff] %vm2239, %v2224
        %v2254 = vld [vmem:[%s1719] sm:$0xe]
        %v2255 = vld [vmem:[%s1719 + $0x4] sm:$0xf]
        %v2256 = vld [vmem:[%s1719 + $0x8] sm:$0x1]
        %v2257 = vld [vmem:[%s1719 + $0xc] sm:$0xe]
        %v2258 = vld [vmem:[%s1719 + $0x10] sm:$0xf]
        %v2259 = vld [vmem:[%s1719 + $0x14] sm:$0x1]
        %v2260 = vld [vmem:[%s1719 + $0x18] sm:$0xe]
        %v2261 = vld [vmem:[%s1719 + $0x1c] sm:$0xf]
        %v2262 = vld [vmem:[%s1719 + $0x20] sm:$0x1]
        %v2263 = vld [vmem:[%s1719 + $0x24] sm:$0xe]
        %v2264 = vld [vmem:[%s1719 + $0x28] sm:$0xf]
        %v2265 = vld [vmem:[%s1719 + $0x2c] sm:$0x1]
        %v2266 = vld [vmem:[%s1719 + $0x30] sm:$0xe]
        %v2267 = vld [vmem:[%s1719 + $0x34] sm:$0xf]
        %v2268 = vld [vmem:[%s1719 + $0x38] sm:$0x1]
        %v2269 = vld [vmem:[%s1719 + $0x3c] sm:$0xe]
        %v2270 = vld [vmem:[%s1719 + $0x40] sm:$0xf]
        %v2271 = vld [vmem:[%s1719 + $0x44] sm:$0x1]
        %v2272 = vld [vmem:[%s1719 + $0x48] sm:$0xe]
        %v2273 = vld [vmem:[%s1719 + $0x4c] sm:$0xf]
        %v2274 = vld [vmem:[%s1719 + $0x50] sm:$0x1]
        %v2275 = vld [vmem:[%s1719 + $0x54] sm:$0xe]
        %v2276 = vld [vmem:[%s1719 + $0x58] sm:$0xf]
        %v2277 = vld [vmem:[%s1719 + $0x5c] sm:$0x1]
        %v2278 = vld [vmem:[%s1719 + $0x60] sm:$0xe]
        %v2279 = vld [vmem:[%s1719 + $0x64] sm:$0xf]
        %v2280 = vld [vmem:[%s1719 + $0x68] sm:$0x1]
        %v2281 = vld [vmem:[%s1719 + $0x6c] sm:$0xe]
        %v2282 = vld [vmem:[%s1719 + $0x70] sm:$0xf]
        %v2283 = vld [vmem:[%s1719 + $0x74] sm:$0x1]
        %v2284 = vld [vmem:[%s1719 + $0x78] sm:$0xe]
        %v2285 = vld [vmem:[%s1719 + $0x7c] sm:$0xf]
        %v2286 = vld [vmem:[%s1719 + $0x80] sm:$0x1]
        %v2287 = vld [vmem:[%s1719 + $0x84] sm:$0xe]
        %v2288 = vld [vmem:[%s1719 + $0x88] sm:$0xf]
        %v2289 = vld [vmem:[%s1719 + $0x8c] sm:$0x1]
        %v2290 = vld [vmem:[%s1719 + $0x90] sm:$0xe]
        %v2291 = vld [vmem:[%s1719 + $0x94] sm:$0xf]
        %v2292 = vld [vmem:[%s1719 + $0x98] sm:$0x1]
        %v2293 = vld [vmem:[%s1719 + $0x9c] sm:$0xe]
        %v2294 = vld [vmem:[%s1719 + $0xa0] sm:$0xf]
        %v2295 = vld [vmem:[%s1719 + $0xa4] sm:$0x1]
        %v2338 = vunpack.c.l.b16 %v2254
        %v2339 = vunpack.c.l.b16 %v2255
        %v2340 = vunpack.c.l.b16 %v2256
        %v2341 = vunpack.c.l.b16 %v2257
        %v2342 = vunpack.c.l.b16 %v2258
        %v2343 = vunpack.c.l.b16 %v2259
        %v2344 = vunpack.c.l.b16 %v2260
        %v2345 = vunpack.c.l.b16 %v2261
        %v2346 = vunpack.c.l.b16 %v2262
        %v2347 = vunpack.c.l.b16 %v2263
        %v2348 = vunpack.c.l.b16 %v2264
        %v2349 = vunpack.c.l.b16 %v2265
        %v2350 = vunpack.c.l.b16 %v2266
        %v2351 = vunpack.c.l.b16 %v2267
        %v2352 = vunpack.c.l.b16 %v2268
        %v2353 = vunpack.c.l.b16 %v2269
        %v2354 = vunpack.c.l.b16 %v2270
        %v2355 = vunpack.c.l.b16 %v2271
        %v2356 = vunpack.c.l.b16 %v2272
        %v2357 = vunpack.c.l.b16 %v2273
        %v2358 = vunpack.c.l.b16 %v2274
        %v2359 = vunpack.c.l.b16 %v2275
        %v2360 = vunpack.c.l.b16 %v2276
        %v2361 = vunpack.c.l.b16 %v2277
        %v2362 = vunpack.c.l.b16 %v2278
        %v2363 = vunpack.c.l.b16 %v2279
        %v2364 = vunpack.c.l.b16 %v2280
        %v2365 = vunpack.c.l.b16 %v2281
        %v2366 = vunpack.c.l.b16 %v2282
        %v2367 = vunpack.c.l.b16 %v2283
        %v2368 = vunpack.c.l.b16 %v2284
        %v2369 = vunpack.c.l.b16 %v2285
        %v2370 = vunpack.c.l.b16 %v2286
        %v2371 = vunpack.c.l.b16 %v2287
        %v2372 = vunpack.c.l.b16 %v2288
        %v2373 = vunpack.c.l.b16 %v2289
        %v2374 = vunpack.c.l.b16 %v2290
        %v2375 = vunpack.c.l.b16 %v2291
        %v2376 = vunpack.c.l.b16 %v2292
        %v2377 = vunpack.c.l.b16 %v2293
        %v2378 = vunpack.c.l.b16 %v2294
        %v2379 = vunpack.c.l.b16 %v2295
        %v2380 = vpack.c.b16 %v2339, %v2338
        %v2381 = vpack.c.b16 %v2340, %v2340
        %v2382 = vpack.c.b16 %v2342, %v2341
        %v2383 = vpack.c.b16 %v2343, %v2343
        %v2384 = vpack.c.b16 %v2345, %v2344
        %v2385 = vpack.c.b16 %v2346, %v2346
        %v2386 = vpack.c.b16 %v2348, %v2347
        %v2387 = vpack.c.b16 %v2349, %v2349
        %v2388 = vpack.c.b16 %v2351, %v2350
        %v2389 = vpack.c.b16 %v2352, %v2352
        %v2390 = vpack.c.b16 %v2354, %v2353
        %v2391 = vpack.c.b16 %v2355, %v2355
        %v2392 = vpack.c.b16 %v2357, %v2356
        %v2393 = vpack.c.b16 %v2358, %v2358
        %v2394 = vpack.c.b16 %v2360, %v2359
        %v2395 = vpack.c.b16 %v2361, %v2361
        %v2396 = vpack.c.b16 %v2363, %v2362
        %v2397 = vpack.c.b16 %v2364, %v2364
        %v2398 = vpack.c.b16 %v2366, %v2365
        %v2399 = vpack.c.b16 %v2367, %v2367
        %v2400 = vpack.c.b16 %v2369, %v2368
        %v2401 = vpack.c.b16 %v2370, %v2370
        %v2402 = vpack.c.b16 %v2372, %v2371
        %v2403 = vpack.c.b16 %v2373, %v2373
        %v2404 = vpack.c.b16 %v2375, %v2374
        %v2405 = vpack.c.b16 %v2376, %v2376
        %v2406 = vpack.c.b16 %v2378, %v2377
        %v2407 = vpack.c.b16 %v2379, %v2379
        %v2408 = vrot.slane %v2380, 1
        %v2409 = vrot.slane %v2381, 1
        %v2410 = vsel %vm831, %v2408, %v2409
        %v2411 = vrot.slane %v2382, 1
        %v2412 = vrot.slane %v2383, 1
        %v2413 = vsel %vm831, %v2411, %v2412
        %v2414 = vrot.slane %v2384, 1
        %v2415 = vrot.slane %v2385, 1
        %v2416 = vsel %vm831, %v2414, %v2415
        %v2417 = vrot.slane %v2386, 1
        %v2418 = vrot.slane %v2387, 1
        %v2419 = vsel %vm831, %v2417, %v2418
        %v2420 = vrot.slane %v2388, 1
        %v2421 = vrot.slane %v2389, 1
        %v2422 = vsel %vm831, %v2420, %v2421
        %v2423 = vrot.slane %v2390, 1
        %v2424 = vrot.slane %v2391, 1
        %v2425 = vsel %vm831, %v2423, %v2424
        %v2426 = vrot.slane %v2392, 1
        %v2427 = vrot.slane %v2393, 1
        %v2428 = vsel %vm831, %v2426, %v2427
        %v2429 = vrot.slane %v2394, 1
        %v2430 = vrot.slane %v2395, 1
        %v2431 = vsel %vm831, %v2429, %v2430
        %v2432 = vrot.slane %v2396, 1
        %v2433 = vrot.slane %v2397, 1
        %v2434 = vsel %vm831, %v2432, %v2433
        %v2435 = vrot.slane %v2398, 1
        %v2436 = vrot.slane %v2399, 1
        %v2437 = vsel %vm831, %v2435, %v2436
        %v2438 = vrot.slane %v2400, 1
        %v2439 = vrot.slane %v2401, 1
        %v2440 = vsel %vm831, %v2438, %v2439
        %v2441 = vrot.slane %v2402, 1
        %v2442 = vrot.slane %v2403, 1
        %v2443 = vsel %vm831, %v2441, %v2442
        %v2444 = vrot.slane %v2404, 1
        %v2445 = vrot.slane %v2405, 1
        %v2446 = vsel %vm831, %v2444, %v2445
        %v2447 = vrot.slane %v2406, 1
        %v2448 = vrot.slane %v2407, 1
        %v2449 = vsel %vm831, %v2447, %v2448
        %2450 = vrot.lane.b32.xlu0 %v2410, 32
        %v2451 = vpop.permute.xlu0 %2450
        %2452 = vrot.lane.b32.xlu0 %v2413, 32
        %v2453 = vpop.permute.xlu0 %2452
        %2454 = vrot.lane.b32.xlu0 %v2416, 32
        %v2455 = vpop.permute.xlu0 %2454
        %2456 = vrot.lane.b32.xlu0 %v2419, 32
        %v2457 = vpop.permute.xlu0 %2456
        %2458 = vrot.lane.b32.xlu0 %v2422, 32
        %v2459 = vpop.permute.xlu0 %2458
        %2460 = vrot.lane.b32.xlu0 %v2425, 32
        %v2461 = vpop.permute.xlu0 %2460
        %2462 = vrot.lane.b32.xlu0 %v2428, 32
        %v2463 = vpop.permute.xlu0 %2462
        %2464 = vrot.lane.b32.xlu0 %v2431, 32
        %v2465 = vpop.permute.xlu0 %2464
        %2466 = vrot.lane.b32.xlu0 %v2434, 32
        %v2467 = vpop.permute.xlu0 %2466
        %2468 = vrot.lane.b32.xlu0 %v2437, 32
        %v2469 = vpop.permute.xlu0 %2468
        %2470 = vrot.lane.b32.xlu0 %v2440, 32
        %v2471 = vpop.permute.xlu0 %2470
        %2472 = vrot.lane.b32.xlu0 %v2443, 32
        %v2473 = vpop.permute.xlu0 %2472
        %2474 = vrot.lane.b32.xlu0 %v2446, 32
        %v2475 = vpop.permute.xlu0 %2474
        %2476 = vrot.lane.b32.xlu0 %v2449, 32
        %v2477 = vpop.permute.xlu0 %2476
        %vm2492 = vcmask 294144
        %2493 = vst.msk [vmem:[#allocation2] sm:$0xff] %vm2492, %v2451
        %2494 = vst.msk [vmem:[#allocation2 + $0x8] sm:$0xff] %vm2492, %v2453
        %2495 = vst.msk [vmem:[#allocation2 + $0x10] sm:$0xff] %vm2492, %v2455
        %2496 = vst.msk [vmem:[#allocation2 + $0x18] sm:$0xff] %vm2492, %v2457
        %2497 = vst.msk [vmem:[#allocation2 + $0x20] sm:$0xff] %vm2492, %v2459
        %2498 = vst.msk [vmem:[#allocation2 + $0x28] sm:$0xff] %vm2492, %v2461
        %2499 = vst.msk [vmem:[#allocation2 + $0x30] sm:$0xff] %vm2492, %v2463
        %2500 = vst.msk [vmem:[#allocation2 + $0x38] sm:$0xff] %vm2492, %v2465
        %2501 = vst.msk [vmem:[#allocation2 + $0x40] sm:$0xff] %vm2492, %v2467
        %2502 = vst.msk [vmem:[#allocation2 + $0x48] sm:$0xff] %vm2492, %v2469
        %2503 = vst.msk [vmem:[#allocation2 + $0x50] sm:$0xff] %vm2492, %v2471
        %2504 = vst.msk [vmem:[#allocation2 + $0x58] sm:$0xff] %vm2492, %v2473
        %2505 = vst.msk [vmem:[#allocation2 + $0x60] sm:$0xff] %vm2492, %v2475
        %2506 = vst.msk [vmem:[#allocation2 + $0x68] sm:$0xff] %vm2492, %v2477
        %v2507 = vld [vmem:[#allocation2] sm:$0xff]
        %v2508 = vld [vmem:[#allocation2 + $0x8] sm:$0xff]
        %v2509 = vld [vmem:[#allocation2 + $0x10] sm:$0xff]
        %v2510 = vld [vmem:[#allocation2 + $0x18] sm:$0xff]
        %v2511 = vld [vmem:[#allocation2 + $0x20] sm:$0xff]
        %v2512 = vld [vmem:[#allocation2 + $0x28] sm:$0xff]
        %v2513 = vld [vmem:[#allocation2 + $0x30] sm:$0xff]
        %v2514 = vld [vmem:[#allocation2 + $0x38] sm:$0xff]
        %v2515 = vld [vmem:[#allocation2 + $0x40] sm:$0xff]
        %v2516 = vld [vmem:[#allocation2 + $0x48] sm:$0xff]
        %v2517 = vld [vmem:[#allocation2 + $0x50] sm:$0xff]
        %v2518 = vld [vmem:[#allocation2 + $0x58] sm:$0xff]
        %v2519 = vld [vmem:[#allocation2 + $0x60] sm:$0xff]
        %v2520 = vld [vmem:[#allocation2 + $0x68] sm:$0xff]
        %v2521 = vld [vmem:[%s1] sm:$0xf]
        %v2522 = vld [vmem:[%s1 + $0x4] sm:$0xf]
        %v2523 = vld [vmem:[%s1 + $0x8] sm:$0xf]
        %v2524 = vld [vmem:[%s1 + $0xc] sm:$0xf]
        %v2525 = vld [vmem:[%s1 + $0x10] sm:$0x3]
        %v2526 = vld [vmem:[%s2] sm:$0x1]
        %v2528 = vlaneseq
        %v2529 = vshrl.u32 %v2528, 7
        %v2530 = vsub.s32 0, %v2529
        %v2531 = vrot.slane %v2526, %v2530
        %v2538 = vunpack.c.l.b16 %v2521
        %v2539 = vunpack.c.l.b16 %v2522
        %v2540 = vunpack.c.l.b16 %v2523
        %v2541 = vunpack.c.l.b16 %v2524
        %v2542 = vunpack.c.l.b16 %v2525
        %v2543 = vpack.c.b16 %v2539, %v2538
        %v2544 = vpack.c.b16 %v2541, %v2540
        %v2545 = vpack.c.b16 %v2542, %v2542
        %vm2548 = vcmask 293888
        %v2550 = vsel %vm2548, %v2507, 0
        %v2553 = vsel %vm2548, %v2508, 0
        %v2556 = vsel %vm2548, %v2509, 0
        %v2559 = vsel %vm2548, %v2510, 0
        %v2562 = vsel %vm2548, %v2511, 0
        %v2565 = vsel %vm2548, %v2512, 0
        %v2568 = vsel %vm2548, %v2513, 0
        %v2571 = vsel %vm2548, %v2514, 0
        %v2574 = vsel %vm2548, %v2515, 0
        %v2577 = vsel %vm2548, %v2516, 0
        %v2580 = vsel %vm2548, %v2517, 0
        %v2583 = vsel %vm2548, %v2518, 0
        %v2586 = vsel %vm2548, %v2519, 0
        %v2589 = vsel %vm2548, %v2520, 0
        %vm2591 = vcmask 1041408
        %v2593 = vsel %vm2591, %v2545, 0
        %2595 = vmatprep.subr.bf16.mxu0 0
        %2596 = vmatpush1.bf16.msra.mxu0 %v2543
        %2597 = vmatprep.subr.bf16.mxu0 0
        %2598 = vmatpush1.bf16.msra.mxu0 %v2544
        %2599 = vmatprep.subr.bf16.mxu0 0
        %2600 = vmatpush1.bf16.msra.mxu0 %v2593
        %2601 = vmatprep.subr.bf16.mxu0 0
        %2602 = vmatpush1.bf16.msra.mxu0 0
        %2603 = vmatprep.subr.bf16.mxu0 0
        %2604 = vmatpush1.bf16.msra.mxu0 0
        %2605 = vmatprep.subr.bf16.mxu0 0
        %2606 = vmatpush1.bf16.msra.mxu0 0
        %2607 = vmatprep.subr.bf16.mxu0 0
        %2608 = vmatpush1.bf16.msra.mxu0 0
        %2609 = vmatprep.subr.bf16.mxu0 0
        %2610 = vmatpush1.bf16.msra.mxu0 0
        %2611 = vmatprep.subr.bf16.mxu0 0
        %2612 = vmatpush1.bf16.msra.mxu0 0
        %2613 = vmatprep.subr.bf16.mxu0 0
        %2614 = vmatpush1.bf16.msra.mxu0 0
        %2615 = vmatprep.subr.bf16.mxu0 0
        %2616 = vmatpush1.bf16.msra.mxu0 0
        %2617 = vmatprep.subr.bf16.mxu0 0
        %2618 = vmatpush1.bf16.msra.mxu0 0
        %2619 = vmatprep.subr.bf16.mxu0 0
        %2620 = vmatpush1.bf16.msra.mxu0 0
        %2621 = vmatprep.subr.bf16.mxu0 0
        %2622 = vmatpush1.bf16.msra.mxu0 0
        %2623 = vmatprep.subr.bf16.mxu0 0
        %2624 = vmatpush1.bf16.msra.mxu0 0
        %2625 = vmatprep.subr.bf16.mxu0 0
        %2626 = vmatpush1.bf16.msra.mxu0 0
        %2627 = vmatprep.mubr.bf16.mxu0 0
        %2628 = vmatmul.mubr.bf16.gmra.mrb[0].mxu0 %v2550
        %v2629 = vpop.f32.mrb[0].mxu0
        %v2630 = vadd.f32 %v2531, %v2629
        %v2631 = vpop.f32.mrb[0].mxu0
        %v2632 = vpop.f32.mrb[0].mxu0
        %v2633 = vadd.f32 %v2531, %v2632
        %v2634 = vpop.f32.mrb[0].mxu0
        %2635 = vmatprep.mubr.bf16.mxu0 0
        %2636 = vmatmul.mubr.bf16.gmra.mrb[0].mxu0 %v2553
        %v2637 = vpop.f32.mrb[0].mxu0
        %v2638 = vadd.f32 %v2531, %v2637
        %v2639 = vpop.f32.mrb[0].mxu0
        %v2640 = vpop.f32.mrb[0].mxu0
        %v2641 = vadd.f32 %v2531, %v2640
        %v2642 = vpop.f32.mrb[0].mxu0
        %2643 = vmatprep.mubr.bf16.mxu0 0
        %2644 = vmatmul.mubr.bf16.gmra.mrb[0].mxu0 %v2556
        %v2645 = vpop.f32.mrb[0].mxu0
        %v2646 = vadd.f32 %v2531, %v2645
        %v2647 = vpop.f32.mrb[0].mxu0
        %v2648 = vpop.f32.mrb[0].mxu0
        %v2649 = vadd.f32 %v2531, %v2648
        %v2650 = vpop.f32.mrb[0].mxu0
        %2651 = vmatprep.mubr.bf16.mxu0 0
        %2652 = vmatmul.mubr.bf16.gmra.mrb[0].mxu0 %v2559
        %v2653 = vpop.f32.mrb[0].mxu0
        %v2654 = vadd.f32 %v2531, %v2653
        %v2655 = vpop.f32.mrb[0].mxu0
        %v2656 = vpop.f32.mrb[0].mxu0
        %v2657 = vadd.f32 %v2531, %v2656
        %v2658 = vpop.f32.mrb[0].mxu0
        %2659 = vmatprep.mubr.bf16.mxu0 0
        %2660 = vmatmul.mubr.bf16.gmra.mrb[0].mxu0 %v2562
        %v2661 = vpop.f32.mrb[0].mxu0
        %v2662 = vadd.f32 %v2531, %v2661
        %v2663 = vpop.f32.mrb[0].mxu0
        %v2664 = vpop.f32.mrb[0].mxu0
        %v2665 = vadd.f32 %v2531, %v2664
        %v2666 = vpop.f32.mrb[0].mxu0
        %2667 = vmatprep.mubr.bf16.mxu0 0
        %2668 = vmatmul.mubr.bf16.gmra.mrb[0].mxu0 %v2565
        %v2669 = vpop.f32.mrb[0].mxu0
        %v2670 = vadd.f32 %v2531, %v2669
        %v2671 = vpop.f32.mrb[0].mxu0
        %v2672 = vpop.f32.mrb[0].mxu0
        %v2673 = vadd.f32 %v2531, %v2672
        %v2674 = vpop.f32.mrb[0].mxu0
        %2675 = vmatprep.mubr.bf16.mxu0 0
        %2676 = vmatmul.mubr.bf16.gmra.mrb[0].mxu0 %v2568
        %v2677 = vpop.f32.mrb[0].mxu0
        %v2678 = vadd.f32 %v2531, %v2677
        %v2679 = vpop.f32.mrb[0].mxu0
        %v2680 = vpop.f32.mrb[0].mxu0
        %v2681 = vadd.f32 %v2531, %v2680
        %v2682 = vpop.f32.mrb[0].mxu0
        %2683 = vmatprep.mubr.bf16.mxu0 0
        %2684 = vmatmul.mubr.bf16.gmra.mrb[0].mxu0 %v2571
        %v2685 = vpop.f32.mrb[0].mxu0
        %v2686 = vadd.f32 %v2531, %v2685
        %v2687 = vpop.f32.mrb[0].mxu0
        %v2688 = vpop.f32.mrb[0].mxu0
        %v2689 = vadd.f32 %v2531, %v2688
        %v2690 = vpop.f32.mrb[0].mxu0
        %2691 = vmatprep.mubr.bf16.mxu0 0
        %2692 = vmatmul.mubr.bf16.gmra.mrb[0].mxu0 %v2574
        %v2693 = vpop.f32.mrb[0].mxu0
        %v2694 = vadd.f32 %v2531, %v2693
        %v2695 = vpop.f32.mrb[0].mxu0
        %v2696 = vpop.f32.mrb[0].mxu0
        %v2697 = vadd.f32 %v2531, %v2696
        %v2698 = vpop.f32.mrb[0].mxu0
        %2699 = vmatprep.mubr.bf16.mxu0 0
        %2700 = vmatmul.mubr.bf16.gmra.mrb[0].mxu0 %v2577
        %v2701 = vpop.f32.mrb[0].mxu0
        %v2702 = vadd.f32 %v2531, %v2701
        %v2703 = vpop.f32.mrb[0].mxu0
        %v2704 = vpop.f32.mrb[0].mxu0
        %v2705 = vadd.f32 %v2531, %v2704
        %v2706 = vpop.f32.mrb[0].mxu0
        %2707 = vmatprep.mubr.bf16.mxu0 0
        %2708 = vmatmul.mubr.bf16.gmra.mrb[0].mxu0 %v2580
        %v2709 = vpop.f32.mrb[0].mxu0
        %v2710 = vadd.f32 %v2531, %v2709
        %v2711 = vpop.f32.mrb[0].mxu0
        %v2712 = vpop.f32.mrb[0].mxu0
        %v2713 = vadd.f32 %v2531, %v2712
        %v2714 = vpop.f32.mrb[0].mxu0
        %2715 = vmatprep.mubr.bf16.mxu0 0
        %2716 = vmatmul.mubr.bf16.gmra.mrb[0].mxu0 %v2583
        %v2717 = vpop.f32.mrb[0].mxu0
        %v2718 = vadd.f32 %v2531, %v2717
        %v2719 = vpop.f32.mrb[0].mxu0
        %v2720 = vpop.f32.mrb[0].mxu0
        %v2721 = vadd.f32 %v2531, %v2720
        %v2722 = vpop.f32.mrb[0].mxu0
        %2723 = vmatprep.mubr.bf16.mxu0 0
        %2724 = vmatmul.mubr.bf16.gmra.mrb[0].mxu0 %v2586
        %v2725 = vpop.f32.mrb[0].mxu0
        %v2726 = vadd.f32 %v2531, %v2725
        %v2727 = vpop.f32.mrb[0].mxu0
        %v2728 = vpop.f32.mrb[0].mxu0
        %v2729 = vadd.f32 %v2531, %v2728
        %v2730 = vpop.f32.mrb[0].mxu0
        %2731 = vmatprep.mubr.bf16.mxu0 0
        %2732 = vmatmul.mubr.bf16.gmra.mrb[0].mxu0 %v2589
        %v2733 = vpop.f32.mrb[0].mxu0
        %v2734 = vadd.f32 %v2531, %v2733
        %v2735 = vpop.f32.mrb[0].mxu0
        %v2736 = vpop.f32.mrb[0].mxu0
        %v2737 = vadd.f32 %v2531, %v2736
        %v2738 = vpop.f32.mrb[0].mxu0
        %2739 = vdwg.mxu0
        %v2740 = vpack.c.bf16 %v2633, %v2630
        %v2741 = vpack.c.bf16 %v2641, %v2638
        %v2742 = vpack.c.bf16 %v2649, %v2646
        %v2743 = vpack.c.bf16 %v2657, %v2654
        %v2744 = vpack.c.bf16 %v2665, %v2662
        %v2745 = vpack.c.bf16 %v2673, %v2670
        %v2746 = vpack.c.bf16 %v2681, %v2678
        %v2747 = vpack.c.bf16 %v2689, %v2686
        %v2748 = vpack.c.bf16 %v2697, %v2694
        %v2749 = vpack.c.bf16 %v2705, %v2702
        %v2750 = vpack.c.bf16 %v2713, %v2710
        %v2751 = vpack.c.bf16 %v2721, %v2718
        %v2752 = vpack.c.bf16 %v2729, %v2726
        %v2753 = vpack.c.bf16 %v2737, %v2734
        %v2768 = vunpack.c.l.b16 %v2740
        %v2769 = vunpack.c.h.b16 %v2740
        %v2770 = vunpack.c.l.b16 %v2741
        %v2771 = vunpack.c.h.b16 %v2741
        %v2772 = vunpack.c.l.b16 %v2742
        %v2773 = vunpack.c.h.b16 %v2742
        %v2774 = vunpack.c.l.b16 %v2743
        %v2775 = vunpack.c.h.b16 %v2743
        %v2776 = vunpack.c.l.b16 %v2744
        %v2777 = vunpack.c.h.b16 %v2744
        %v2778 = vunpack.c.l.b16 %v2745
        %v2779 = vunpack.c.h.b16 %v2745
        %v2780 = vunpack.c.l.b16 %v2746
        %v2781 = vunpack.c.h.b16 %v2746
        %v2782 = vunpack.c.l.b16 %v2747
        %v2783 = vunpack.c.h.b16 %v2747
        %v2784 = vunpack.c.l.b16 %v2748
        %v2785 = vunpack.c.h.b16 %v2748
        %v2786 = vunpack.c.l.b16 %v2749
        %v2787 = vunpack.c.h.b16 %v2749
        %v2788 = vunpack.c.l.b16 %v2750
        %v2789 = vunpack.c.h.b16 %v2750
        %v2790 = vunpack.c.l.b16 %v2751
        %v2791 = vunpack.c.h.b16 %v2751
        %v2792 = vunpack.c.l.b16 %v2752
        %v2793 = vunpack.c.h.b16 %v2752
        %v2794 = vunpack.c.l.b16 %v2753
        %v2795 = vunpack.c.h.b16 %v2753
        %v2796 = vpack.c.b16 %v2768, %v2768
        %v2797 = vpack.c.b16 %v2769, %v2769
        %v2798 = vpack.c.b16 %v2770, %v2770
        %v2799 = vpack.c.b16 %v2771, %v2771
        %v2800 = vpack.c.b16 %v2772, %v2772
        %v2801 = vpack.c.b16 %v2773, %v2773
        %v2802 = vpack.c.b16 %v2774, %v2774
        %v2803 = vpack.c.b16 %v2775, %v2775
        %v2804 = vpack.c.b16 %v2776, %v2776
        %v2805 = vpack.c.b16 %v2777, %v2777
        %v2806 = vpack.c.b16 %v2778, %v2778
        %v2807 = vpack.c.b16 %v2779, %v2779
        %v2808 = vpack.c.b16 %v2780, %v2780
        %v2809 = vpack.c.b16 %v2781, %v2781
        %v2810 = vpack.c.b16 %v2782, %v2782
        %v2811 = vpack.c.b16 %v2783, %v2783
        %v2812 = vpack.c.b16 %v2784, %v2784
        %v2813 = vpack.c.b16 %v2785, %v2785
        %v2814 = vpack.c.b16 %v2786, %v2786
        %v2815 = vpack.c.b16 %v2787, %v2787
        %v2816 = vpack.c.b16 %v2788, %v2788
        %v2817 = vpack.c.b16 %v2789, %v2789
        %v2818 = vpack.c.b16 %v2790, %v2790
        %v2819 = vpack.c.b16 %v2791, %v2791
        %v2820 = vpack.c.b16 %v2792, %v2792
        %v2821 = vpack.c.b16 %v2793, %v2793
        %v2822 = vpack.c.b16 %v2794, %v2794
        %v2823 = vpack.c.b16 %v2795, %v2795
        %2852 = vst [vmem:[%s163] sm:$0xf] %v2796
        %2853 = vst [vmem:[%s163 + $0x4] sm:$0xf] %v2797
        %2854 = vst [vmem:[%s163 + $0x8] sm:$0xf] %v2798
        %2855 = vst [vmem:[%s163 + $0xc] sm:$0xf] %v2799
        %2856 = vst [vmem:[%s163 + $0x10] sm:$0xf] %v2800
        %2857 = vst [vmem:[%s163 + $0x14] sm:$0xf] %v2801
        %2858 = vst [vmem:[%s163 + $0x18] sm:$0xf] %v2802
        %2859 = vst [vmem:[%s163 + $0x1c] sm:$0xf] %v2803
        %2860 = vst [vmem:[%s163 + $0x20] sm:$0xf] %v2804
        %2861 = vst [vmem:[%s163 + $0x24] sm:$0xf] %v2805
        %2862 = vst [vmem:[%s163 + $0x28] sm:$0xf] %v2806
        %2863 = vst [vmem:[%s163 + $0x2c] sm:$0xf] %v2807
        %2864 = vst [vmem:[%s163 + $0x30] sm:$0xf] %v2808
        %2865 = vst [vmem:[%s163 + $0x34] sm:$0xf] %v2809
        %2866 = vst [vmem:[%s163 + $0x38] sm:$0xf] %v2810
        %2867 = vst [vmem:[%s163 + $0x3c] sm:$0xf] %v2811
        %2868 = vst [vmem:[%s163 + $0x40] sm:$0xf] %v2812
        %2869 = vst [vmem:[%s163 + $0x44] sm:$0xf] %v2813
        %2870 = vst [vmem:[%s163 + $0x48] sm:$0xf] %v2814
        %2871 = vst [vmem:[%s163 + $0x4c] sm:$0xf] %v2815
        %2872 = vst [vmem:[%s163 + $0x50] sm:$0xf] %v2816
        %2873 = vst [vmem:[%s163 + $0x54] sm:$0xf] %v2817
        %2874 = vst [vmem:[%s163 + $0x58] sm:$0xf] %v2818
        %2875 = vst [vmem:[%s163 + $0x5c] sm:$0xf] %v2819
        %2876 = vst [vmem:[%s163 + $0x60] sm:$0xf] %v2820
        %2877 = vst [vmem:[%s163 + $0x64] sm:$0xf] %v2821
        %2878 = vst [vmem:[%s163 + $0x68] sm:$0xf] %v2822
        %2879 = vst [vmem:[%s163 + $0x6c] sm:$0xf] %v2823
        %s2880 = sand.u32 %s93, 1
        %s2881 = scalar_lea.sflag [#allocation4], %s2880
        %s2882 = sand.u32 %s93, 1
        %s2883 = smul.addr %s2882, 112
        %s2884 = scalar_lea.vmem [#allocation3], %s2883
        // Predicated region
        $region33: #{tpu_custom_call.1} parent=31 // pred_check
          %p2885 = pneg %p103
        $region34: #{tpu_custom_call.1} parent=31 // pred_check_branch
          %2887 = sbr.rel (%p2885) target = $region36
        $region35: #{tpu_custom_call.1} parent=31 // pred_region
          %s2889 = ssub.s32 1792, 1792
          %2890 = vsyncadd %s2881, %s2889
          %s2891 = smul.addr %s17, 28
          %s2892 = smul.addr %s2891, 64
          %s2893 = scalar_lea.hbm %s3, %s2892
          %s2894 = sshll.u32 %s2884, 4
          %s2895 = int_to_ptr.vmem [resolvable:$true] %s2894
          %2900 = dma.vmem_to_hbm [thread:$0]  %s2895, 1792, %s2893, %s2881, 64, 64, 4
        $region36: #{tpu_custom_call.1} parent=31 // pred_fallthru
          _
      $region32: #{tpu_custom_call.1} parent=5 // pred_fallthru
        _
      %p2901 = scmp.le.s32.totalorder 2, %s12
      // Predicated region
      $region37: #{tpu_custom_call.1} parent=5 // pred_check
        %p2902 = pneg %p2901
      $region38: #{tpu_custom_call.1} parent=5 // pred_check_branch
        %2904 = sbr.rel (%p2902) target = $region40
      $region39: #{tpu_custom_call.1} parent=5 // pred_region
        %s2905 = ssub.s32 %s12, 2
        // Predicated region
        $region41: #{tpu_custom_call.1} parent=39 // pred_check
          %p2906 = pneg %p109
        $region42: #{tpu_custom_call.1} parent=39 // pred_check_branch
          %2908 = sbr.rel (%p2906) target = $region44
        $region43: #{tpu_custom_call.1} parent=39 // pred_region
          %s2909 = sand.u32 %s94, 1
          %s2910 = scalar_lea.sflag [#allocation4], %s2909
          %s2911 = sand.u32 %s94, 1
          %s2912 = smul.addr %s2911, 112
          %s2913 = scalar_lea.vmem [#allocation3], %s2912
          %2914 = dma.done %s2910, 1792
        $region44: #{tpu_custom_call.1} parent=39 // pred_fallthru
          _
      $region40: #{tpu_custom_call.1} parent=5 // pred_fallthru
        _
    $region6: #{tpu_custom_call.1} parent=1 // loop_footer
      %s16 = sadd.s32 1, %s12
    $region7: #{tpu_custom_call.1} parent=1 // loop_footer_branch
      %11 = sbr.rel target = $region3
    $region8: #{tpu_custom_call.1} parent=1 // loop_exit
      _
    %2915 = vsyncpa [#allocation4], 1
    %s2916 = scalar_lea.sflag [#allocation4], 1
    %2917 = vsyncpa %s2916, 1

</llo_original>
